<compile_context>
chip_gen: v5e
topology: v5e:2x2
jax: 0.10.0
libtpu: 0.0.40
codegen_flags: <defaults>
</compile_context>

<pallas_src>
import jax
import jax.numpy as jnp
from jax import lax
from jax.experimental import pallas as pl
from jax.experimental.pallas import tpu as pltpu


def _make_lstm_fc_kernel(num_layers, B, T, D, H, C):
    """Builds a Pallas kernel doing the full LSTM recurrence + final FC in registers."""

    def kernel(*refs):
        # inputs: x, then (w_ih_T, w_hh_T, b) per layer, then w_fc_T, b_fc
        x_ref = refs[0]                                   # (T, B, D)   bf16
        layer_refs = refs[1:1 + 3 * num_layers]
        wfc_ref = refs[1 + 3 * num_layers]                # (H, C)      bf16, pre-transposed
        bfc_ref = refs[2 + 3 * num_layers]                # (1, C)      f32
        out_ref = refs[3 + 3 * num_layers]                # (B, C)      f32 output

        # Layer-0 input as one flat (T*B, D) operand for the hoisted projection.
        x_flat = x_ref[...].reshape(T * B, D)             # bf16, off the serial path

        h_last = None
        for l in range(num_layers):
            w_ih = layer_refs[3 * l + 0][...]             # (D_in, 4H) bf16, g-cols pre-scaled x2
            w_hh = layer_refs[3 * l + 1][...]             # (H, 4H)    bf16, g-cols pre-scaled x2
            b = layer_refs[3 * l + 2][...]                # (1, 4H)    f32 (= b_ih + b_hh, g x2)

            # One big matmul per layer: (T*B, D_in) @ (D_in, 4H) + b, off the serial path.
            # Stays in vregs (8 vregs at these shapes) -- no VMEM scratch round-trip.
            pre = (jnp.dot(x_flat, w_ih, preferred_element_type=jnp.float32)
                   + b)                                   # (T*B, 4H) f32

            h = jnp.zeros((B, H), jnp.float32)            # zero initial state (matches forward())
            c = jnp.zeros((B, H), jnp.float32)
            hs = []
            for t in range(T):                            # static unrolled time loop
                gates = (jnp.dot(h.astype(jnp.bfloat16), w_hh,
                                 preferred_element_type=jnp.float32)
                         + pre[t * B:(t + 1) * B, :])     # (B, 4H) f32, static row slice
                # Single full-vreg EUP push; tanh(z) recovered as 2*sigmoid(2z)-1
                # (the wrapper pre-scaled the g-gate weight columns and bias by 2).
                s = jax.nn.sigmoid(gates)
                i = s[:, 0 * H:1 * H]
                f = s[:, 1 * H:2 * H]
                g = 2.0 * s[:, 2 * H:3 * H] - 1.0
                o = s[:, 3 * H:4 * H]
                c = f * c + i * g
                h = o * jnp.tanh(c)
                hs.append(h)
            h_last = h
            if l < num_layers - 1:
                # Inter-layer hidden sequence stays in vregs (no masked VMEM stores).
                x_flat = jnp.concatenate(hs, axis=0).astype(jnp.bfloat16)   # (T*B, H)

        # fc on the last time step's hidden state of the top layer
        logits = (jnp.dot(h_last.astype(jnp.bfloat16), wfc_ref[...],
                          preferred_element_type=jnp.float32)
                  + bfc_ref[...])
        out_ref[...] = logits.astype(out_ref.dtype)

    return kernel


def lstm_baseline_forward(x, params, *, num_layers, hidden_size, num_classes):
    """x: (B, T, input_size) float32 (batch_first, like the PyTorch module)."""
    B, T, D = x.shape
    H, C = hidden_size, num_classes

    x_tm = jnp.transpose(x, (1, 0, 2)).astype(jnp.bfloat16)   # (T, B, D) time-major, bf16

    # x2 scale on the g-gate quarter only (enables the single-sigmoid trick; exact in bf16).
    g_scale = jnp.concatenate([
        jnp.ones((2 * H,), jnp.float32),
        jnp.full((H,), 2.0, jnp.float32),
        jnp.ones((H,), jnp.float32),
    ])

    # Pre-transpose / pre-scale / pre-cast all weights in the XLA wrapper
    # (layout plumbing, zero in-kernel cost).
    flat_inputs = [x_tm]
    for l in range(num_layers):
        w_ih_t = jnp.transpose(params[f"w_ih_{l}"]) * g_scale[None, :]   # (D_in, 4H)
        w_hh_t = jnp.transpose(params[f"w_hh_{l}"]) * g_scale[None, :]   # (H, 4H)
        flat_inputs += [
            w_ih_t.astype(jnp.bfloat16),
            w_hh_t.astype(jnp.bfloat16),
            params[f"b_{l}"] * g_scale[None, :],                          # (1, 4H) f32
        ]
    flat_inputs += [jnp.transpose(params["w_fc"]).astype(jnp.bfloat16),   # (H, C)
                    params["b_fc"]]                                       # (1, C) f32

    kernel = _make_lstm_fc_kernel(num_layers, B, T, D, H, C)
    out = pl.pallas_call(
        kernel,
        out_shape=jax.ShapeDtypeStruct((B, C), jnp.float32),
        in_specs=[pl.BlockSpec(memory_space=pltpu.MemorySpace.VMEM)] * len(flat_inputs),
        out_specs=pl.BlockSpec(memory_space=pltpu.MemorySpace.VMEM),
    )(*flat_inputs)
    return out


def reference_forward(x, params, *, num_layers, hidden_size, num_classes):
    """Pure-JAX full-f32 reference implementing the same math as torch.nn.LSTM + Linear."""
    B, T, D = x.shape
    H = hidden_size
    h_seq = x
    for l in range(num_layers):
        w_ih = params[f"w_ih_{l}"]
        w_hh = params[f"w_hh_{l}"]
        b = params[f"b_{l}"][0]

        def step(carry, x_t):
            h, c = carry
            gates = x_t @ w_ih.T + h @ w_hh.T + b
            i = jax.nn.sigmoid(gates[:, :H])
            f = jax.nn.sigmoid(gates[:, H:2 * H])
            g = jnp.tanh(gates[:, 2 * H:3 * H])
            o = jax.nn.sigmoid(gates[:, 3 * H:])
            c = f * c + i * g
            h = o * jnp.tanh(c)
            return (h, c), h

        init = (jnp.zeros((B, H), jnp.float32), jnp.zeros((B, H), jnp.float32))
        _, hs = lax.scan(step, init, jnp.transpose(h_seq, (1, 0, 2)))
        h_seq = jnp.transpose(hs, (1, 0, 2))
    return h_seq[:, -1, :] @ params["w_fc"].T + params["b_fc"][0]


def reference_forward_mixed(x, params, *, num_layers, hidden_size, num_classes):
    """Pure-JAX reference with the SAME precision policy as the kernel:
    bf16 matmul operands, f32 accumulation, f32 state/gate elementwise math."""
    B, T, D = x.shape
    H = hidden_size
    bf16 = jnp.bfloat16
    h_seq = x.astype(bf16)
    for l in range(num_layers):
        w_ih = params[f"w_ih_{l}"].astype(bf16)
        w_hh = params[f"w_hh_{l}"].astype(bf16)
        b = params[f"b_{l}"][0]

        def step(carry, x_t):
            h, c = carry
            gates = (jnp.dot(x_t, w_ih.T, preferred_element_type=jnp.float32)
                     + jnp.dot(h.astype(bf16), w_hh.T, preferred_element_type=jnp.float32)
                     + b)
            i = jax.nn.sigmoid(gates[:, :H])
            f = jax.nn.sigmoid(gates[:, H:2 * H])
            g = jnp.tanh(gates[:, 2 * H:3 * H])
            o = jax.nn.sigmoid(gates[:, 3 * H:])
            c = f * c + i * g
            h = o * jnp.tanh(c)
            return (h, c), h.astype(bf16)

        init = (jnp.zeros((B, H), jnp.float32), jnp.zeros((B, H), jnp.float32))
        _, hs = lax.scan(step, init, jnp.transpose(h_seq, (1, 0, 2)))
        h_seq = jnp.transpose(hs, (1, 0, 2))
    h_last = h_seq[:, -1, :]
    return (jnp.dot(h_last, params["w_fc"].T.astype(bf16),
                    preferred_element_type=jnp.float32)
            + params["b_fc"][0])


def init_params(key, *, input_size, hidden_size, num_layers, num_classes):
    """Deterministic uniform(-1/sqrt(H), 1/sqrt(H)) init, PyTorch-style shapes.
    b_{l} holds b_ih + b_hh folded into a single (1, 4H) bias (mathematically identical)."""
    H = hidden_size
    k = 1.0 / jnp.sqrt(jnp.float32(H))
    params = {}
    for l in range(num_layers):
        d_in = input_size if l == 0 else H
        key, k1, k2, k3 = jax.random.split(key, 4)
        params[f"w_ih_{l}"] = jax.random.uniform(k1, (4 * H, d_in), jnp.float32, -k, k)
        params[f"w_hh_{l}"] = jax.random.uniform(k2, (4 * H, H), jnp.float32, -k, k)
        params[f"b_{l}"] = jax.random.uniform(k3, (1, 4 * H), jnp.float32, -k, k)
    key, k1, k2 = jax.random.split(key, 3)
    kf = 1.0 / jnp.sqrt(jnp.float32(H))
    params["w_fc"] = jax.random.uniform(k1, (num_classes, H), jnp.float32, -kf, kf)
    params["b_fc"] = jax.random.uniform(k2, (1, num_classes), jnp.float32, -kf, kf)
    return params


if __name__ == "__main__":
    # small shapes consistent with har_LSTMBaseline forward: x (B, T, input_size)
    B, T = 8, 8
    input_size, hidden_size, num_layers, num_classes = 16, 32, 2, 8

    key = jax.random.PRNGKey(0)
    key, xk = jax.random.split(key)
    x = jax.random.normal(xk, (B, T, input_size), jnp.float32)
    params = init_params(key, input_size=input_size, hidden_size=hidden_size,
                         num_layers=num_layers, num_classes=num_classes)

    out = lstm_baseline_forward(x, params, num_layers=num_layers,
                                hidden_size=hidden_size, num_classes=num_classes)
    out = jax.block_until_ready(out)
    assert out.shape == (B, num_classes)

    # Tight check vs a pure-JAX reference with the identical precision policy
    # (verifies the single-sigmoid rewrite and kernel structure exactly).
    ref_mixed = reference_forward_mixed(x, params, num_layers=num_layers,
                                        hidden_size=hidden_size, num_classes=num_classes)
    assert jnp.allclose(out, ref_mixed, atol=1e-3, rtol=1e-3), \
        "mismatch vs mixed-precision (bf16-matmul) reference"

    # Loose check vs the full-f32 module semantics (bounds bf16-operand drift).
    ref_f32 = reference_forward(x, params, num_layers=num_layers,
                                hidden_size=hidden_size, num_classes=num_classes)
    assert jnp.allclose(out, ref_f32, atol=5e-2, rtol=5e-2), \
        "drift vs full-f32 reference exceeds bf16 budget"

    print("KERNEL_OK")
</pallas_src>

<mosaic_0001>
module attributes {stable_mosaic.version = 11 : i64} {
  func.func @kernel(%arg0: memref<8x8x16xbf16, #tpu.memory_space<vmem>>, %arg1: memref<16x128xbf16, #tpu.memory_space<vmem>>, %arg2: memref<32x128xbf16, #tpu.memory_space<vmem>>, %arg3: memref<1x128xf32, #tpu.memory_space<vmem>>, %arg4: memref<32x128xbf16, #tpu.memory_space<vmem>>, %arg5: memref<32x128xbf16, #tpu.memory_space<vmem>>, %arg6: memref<1x128xf32, #tpu.memory_space<vmem>>, %arg7: memref<32x8xbf16, #tpu.memory_space<vmem>>, %arg8: memref<1x8xf32, #tpu.memory_space<vmem>>, %arg9: memref<8x8xf32, #tpu.memory_space<vmem>>) attributes {dimension_semantics = [], scalar_prefetch = 0 : i64, scratch_operands = 0 : i64, tpu.core_type = #tpu.core_type<tc>} {
    %c0 = arith.constant 0 : index
    %c0_0 = arith.constant 0 : index
    %c0_1 = arith.constant 0 : index
    %0 = vector.load %arg0[%c0, %c0_0, %c0_1] : memref<8x8x16xbf16, #tpu.memory_space<vmem>>, vector<8x8x16xbf16>
    %1 = vector.shape_cast %0 : vector<8x8x16xbf16> to vector<64x16xbf16>
    %c0_2 = arith.constant 0 : index
    %c0_3 = arith.constant 0 : index
    %2 = vector.load %arg1[%c0_2, %c0_3] : memref<16x128xbf16, #tpu.memory_space<vmem>>, vector<16x128xbf16>
    %c0_4 = arith.constant 0 : index
    %c0_5 = arith.constant 0 : index
    %3 = vector.load %arg2[%c0_4, %c0_5] : memref<32x128xbf16, #tpu.memory_space<vmem>>, vector<32x128xbf16>
    %c0_6 = arith.constant 0 : index
    %c0_7 = arith.constant 0 : index
    %4 = vector.load %arg3[%c0_6, %c0_7] : memref<1x128xf32, #tpu.memory_space<vmem>>, vector<1x128xf32>
    %cst = arith.constant dense<0.000000e+00> : vector<64x128xf32>
    %5 = tpu.matmul %1, %2, %cst {dimension_numbers = #tpu.dot_dimension_numbers<[1], [0], [0], [1], [0, 0, 1, 1], [], []>} : vector<64x16xbf16>, vector<16x128xbf16>, vector<64x128xf32> -> vector<64x128xf32>
    %6 = vector.broadcast %4 : vector<1x128xf32> to vector<64x128xf32>
    %7 = arith.addf %5, %6 : vector<64x128xf32>
    %cst_8 = arith.constant 0.000000e+00 : f32
    %8 = vector.broadcast %cst_8 : f32 to vector<8x32xf32>
    %cst_9 = arith.constant 0.000000e+00 : f32
    %9 = vector.broadcast %cst_9 : f32 to vector<8x32xf32>
    %10 = arith.truncf %8 : vector<8x32xf32> to vector<8x32xbf16>
    %cst_10 = arith.constant dense<0.000000e+00> : vector<8x128xf32>
    %11 = tpu.matmul %10, %3, %cst_10 {dimension_numbers = #tpu.dot_dimension_numbers<[1], [0], [0], [1], [0, 0, 1, 1], [], []>} : vector<8x32xbf16>, vector<32x128xbf16>, vector<8x128xf32> -> vector<8x128xf32>
    %12 = vector.extract_strided_slice %7 {offsets = [0, 0], sizes = [8, 128], strides = [1, 1]} : vector<64x128xf32> to vector<8x128xf32>
    %13 = arith.addf %11, %12 : vector<8x128xf32>
    %14 = arith.negf %13 : vector<8x128xf32>
    %15 = math.exp %14 : vector<8x128xf32>
    %cst_11 = arith.constant 1.000000e+00 : f32
    %16 = vector.broadcast %cst_11 : f32 to vector<8x128xf32>
    %17 = arith.addf %16, %15 : vector<8x128xf32>
    %18 = arith.divf %16, %17 : vector<8x128xf32>
    %19 = vector.extract_strided_slice %18 {offsets = [0, 0], sizes = [8, 32], strides = [1, 1]} : vector<8x128xf32> to vector<8x32xf32>
    %20 = vector.extract_strided_slice %18 {offsets = [0, 32], sizes = [8, 32], strides = [1, 1]} : vector<8x128xf32> to vector<8x32xf32>
    %21 = vector.extract_strided_slice %18 {offsets = [0, 64], sizes = [8, 32], strides = [1, 1]} : vector<8x128xf32> to vector<8x32xf32>
    %cst_12 = arith.constant 2.000000e+00 : f32
    %22 = vector.broadcast %cst_12 : f32 to vector<8x32xf32>
    %23 = arith.mulf %22, %21 : vector<8x32xf32>
    %cst_13 = arith.constant 1.000000e+00 : f32
    %24 = vector.broadcast %cst_13 : f32 to vector<8x32xf32>
    %25 = arith.subf %23, %24 : vector<8x32xf32>
    %26 = vector.extract_strided_slice %18 {offsets = [0, 96], sizes = [8, 32], strides = [1, 1]} : vector<8x128xf32> to vector<8x32xf32>
    %27 = arith.mulf %20, %9 : vector<8x32xf32>
    %28 = arith.mulf %19, %25 : vector<8x32xf32>
    %29 = arith.addf %27, %28 : vector<8x32xf32>
    %30 = math.tanh %29 : vector<8x32xf32>
    %31 = arith.mulf %26, %30 : vector<8x32xf32>
    %32 = arith.truncf %31 : vector<8x32xf32> to vector<8x32xbf16>
    %cst_14 = arith.constant dense<0.000000e+00> : vector<8x128xf32>
    %33 = tpu.matmul %32, %3, %cst_14 {dimension_numbers = #tpu.dot_dimension_numbers<[1], [0], [0], [1], [0, 0, 1, 1], [], []>} : vector<8x32xbf16>, vector<32x128xbf16>, vector<8x128xf32> -> vector<8x128xf32>
    %34 = vector.extract_strided_slice %7 {offsets = [8, 0], sizes = [8, 128], strides = [1, 1]} : vector<64x128xf32> to vector<8x128xf32>
    %35 = arith.addf %33, %34 : vector<8x128xf32>
    %36 = arith.negf %35 : vector<8x128xf32>
    %37 = math.exp %36 : vector<8x128xf32>
    %cst_15 = arith.constant 1.000000e+00 : f32
    %38 = vector.broadcast %cst_15 : f32 to vector<8x128xf32>
    %39 = arith.addf %38, %37 : vector<8x128xf32>
    %40 = arith.divf %38, %39 : vector<8x128xf32>
    %41 = vector.extract_strided_slice %40 {offsets = [0, 0], sizes = [8, 32], strides = [1, 1]} : vector<8x128xf32> to vector<8x32xf32>
    %42 = vector.extract_strided_slice %40 {offsets = [0, 32], sizes = [8, 32], strides = [1, 1]} : vector<8x128xf32> to vector<8x32xf32>
    %43 = vector.extract_strided_slice %40 {offsets = [0, 64], sizes = [8, 32], strides = [1, 1]} : vector<8x128xf32> to vector<8x32xf32>
    %cst_16 = arith.constant 2.000000e+00 : f32
    %44 = vector.broadcast %cst_16 : f32 to vector<8x32xf32>
    %45 = arith.mulf %44, %43 : vector<8x32xf32>
    %cst_17 = arith.constant 1.000000e+00 : f32
    %46 = vector.broadcast %cst_17 : f32 to vector<8x32xf32>
    %47 = arith.subf %45, %46 : vector<8x32xf32>
    %48 = vector.extract_strided_slice %40 {offsets = [0, 96], sizes = [8, 32], strides = [1, 1]} : vector<8x128xf32> to vector<8x32xf32>
    %49 = arith.mulf %42, %29 : vector<8x32xf32>
    %50 = arith.mulf %41, %47 : vector<8x32xf32>
    %51 = arith.addf %49, %50 : vector<8x32xf32>
    %52 = math.tanh %51 : vector<8x32xf32>
    %53 = arith.mulf %48, %52 : vector<8x32xf32>
    %54 = arith.truncf %53 : vector<8x32xf32> to vector<8x32xbf16>
    %cst_18 = arith.constant dense<0.000000e+00> : vector<8x128xf32>
    %55 = tpu.matmul %54, %3, %cst_18 {dimension_numbers = #tpu.dot_dimension_numbers<[1], [0], [0], [1], [0, 0, 1, 1], [], []>} : vector<8x32xbf16>, vector<32x128xbf16>, vector<8x128xf32> -> vector<8x128xf32>
    %56 = vector.extract_strided_slice %7 {offsets = [16, 0], sizes = [8, 128], strides = [1, 1]} : vector<64x128xf32> to vector<8x128xf32>
    %57 = arith.addf %55, %56 : vector<8x128xf32>
    %58 = arith.negf %57 : vector<8x128xf32>
    %59 = math.exp %58 : vector<8x128xf32>
    %cst_19 = arith.constant 1.000000e+00 : f32
    %60 = vector.broadcast %cst_19 : f32 to vector<8x128xf32>
    %61 = arith.addf %60, %59 : vector<8x128xf32>
    %62 = arith.divf %60, %61 : vector<8x128xf32>
    %63 = vector.extract_strided_slice %62 {offsets = [0, 0], sizes = [8, 32], strides = [1, 1]} : vector<8x128xf32> to vector<8x32xf32>
    %64 = vector.extract_strided_slice %62 {offsets = [0, 32], sizes = [8, 32], strides = [1, 1]} : vector<8x128xf32> to vector<8x32xf32>
    %65 = vector.extract_strided_slice %62 {offsets = [0, 64], sizes = [8, 32], strides = [1, 1]} : vector<8x128xf32> to vector<8x32xf32>
    %cst_20 = arith.constant 2.000000e+00 : f32
    %66 = vector.broadcast %cst_20 : f32 to vector<8x32xf32>
    %67 = arith.mulf %66, %65 : vector<8x32xf32>
    %cst_21 = arith.constant 1.000000e+00 : f32
    %68 = vector.broadcast %cst_21 : f32 to vector<8x32xf32>
    %69 = arith.subf %67, %68 : vector<8x32xf32>
    %70 = vector.extract_strided_slice %62 {offsets = [0, 96], sizes = [8, 32], strides = [1, 1]} : vector<8x128xf32> to vector<8x32xf32>
    %71 = arith.mulf %64, %51 : vector<8x32xf32>
    %72 = arith.mulf %63, %69 : vector<8x32xf32>
    %73 = arith.addf %71, %72 : vector<8x32xf32>
    %74 = math.tanh %73 : vector<8x32xf32>
    %75 = arith.mulf %70, %74 : vector<8x32xf32>
    %76 = arith.truncf %75 : vector<8x32xf32> to vector<8x32xbf16>
    %cst_22 = arith.constant dense<0.000000e+00> : vector<8x128xf32>
    %77 = tpu.matmul %76, %3, %cst_22 {dimension_numbers = #tpu.dot_dimension_numbers<[1], [0], [0], [1], [0, 0, 1, 1], [], []>} : vector<8x32xbf16>, vector<32x128xbf16>, vector<8x128xf32> -> vector<8x128xf32>
    %78 = vector.extract_strided_slice %7 {offsets = [24, 0], sizes = [8, 128], strides = [1, 1]} : vector<64x128xf32> to vector<8x128xf32>
    %79 = arith.addf %77, %78 : vector<8x128xf32>
    %80 = arith.negf %79 : vector<8x128xf32>
    %81 = math.exp %80 : vector<8x128xf32>
    %cst_23 = arith.constant 1.000000e+00 : f32
    %82 = vector.broadcast %cst_23 : f32 to vector<8x128xf32>
    %83 = arith.addf %82, %81 : vector<8x128xf32>
    %84 = arith.divf %82, %83 : vector<8x128xf32>
    %85 = vector.extract_strided_slice %84 {offsets = [0, 0], sizes = [8, 32], strides = [1, 1]} : vector<8x128xf32> to vector<8x32xf32>
    %86 = vector.extract_strided_slice %84 {offsets = [0, 32], sizes = [8, 32], strides = [1, 1]} : vector<8x128xf32> to vector<8x32xf32>
    %87 = vector.extract_strided_slice %84 {offsets = [0, 64], sizes = [8, 32], strides = [1, 1]} : vector<8x128xf32> to vector<8x32xf32>
    %cst_24 = arith.constant 2.000000e+00 : f32
    %88 = vector.broadcast %cst_24 : f32 to vector<8x32xf32>
    %89 = arith.mulf %88, %87 : vector<8x32xf32>
    %cst_25 = arith.constant 1.000000e+00 : f32
    %90 = vector.broadcast %cst_25 : f32 to vector<8x32xf32>
    %91 = arith.subf %89, %90 : vector<8x32xf32>
    %92 = vector.extract_strided_slice %84 {offsets = [0, 96], sizes = [8, 32], strides = [1, 1]} : vector<8x128xf32> to vector<8x32xf32>
    %93 = arith.mulf %86, %73 : vector<8x32xf32>
    %94 = arith.mulf %85, %91 : vector<8x32xf32>
    %95 = arith.addf %93, %94 : vector<8x32xf32>
    %96 = math.tanh %95 : vector<8x32xf32>
    %97 = arith.mulf %92, %96 : vector<8x32xf32>
    %98 = arith.truncf %97 : vector<8x32xf32> to vector<8x32xbf16>
    %cst_26 = arith.constant dense<0.000000e+00> : vector<8x128xf32>
    %99 = tpu.matmul %98, %3, %cst_26 {dimension_numbers = #tpu.dot_dimension_numbers<[1], [0], [0], [1], [0, 0, 1, 1], [], []>} : vector<8x32xbf16>, vector<32x128xbf16>, vector<8x128xf32> -> vector<8x128xf32>
    %100 = vector.extract_strided_slice %7 {offsets = [32, 0], sizes = [8, 128], strides = [1, 1]} : vector<64x128xf32> to vector<8x128xf32>
    %101 = arith.addf %99, %100 : vector<8x128xf32>
    %102 = arith.negf %101 : vector<8x128xf32>
    %103 = math.exp %102 : vector<8x128xf32>
    %cst_27 = arith.constant 1.000000e+00 : f32
    %104 = vector.broadcast %cst_27 : f32 to vector<8x128xf32>
    %105 = arith.addf %104, %103 : vector<8x128xf32>
    %106 = arith.divf %104, %105 : vector<8x128xf32>
    %107 = vector.extract_strided_slice %106 {offsets = [0, 0], sizes = [8, 32], strides = [1, 1]} : vector<8x128xf32> to vector<8x32xf32>
    %108 = vector.extract_strided_slice %106 {offsets = [0, 32], sizes = [8, 32], strides = [1, 1]} : vector<8x128xf32> to vector<8x32xf32>
    %109 = vector.extract_strided_slice %106 {offsets = [0, 64], sizes = [8, 32], strides = [1, 1]} : vector<8x128xf32> to vector<8x32xf32>
    %cst_28 = arith.constant 2.000000e+00 : f32
    %110 = vector.broadcast %cst_28 : f32 to vector<8x32xf32>
    %111 = arith.mulf %110, %109 : vector<8x32xf32>
    %cst_29 = arith.constant 1.000000e+00 : f32
    %112 = vector.broadcast %cst_29 : f32 to vector<8x32xf32>
    %113 = arith.subf %111, %112 : vector<8x32xf32>
    %114 = vector.extract_strided_slice %106 {offsets = [0, 96], sizes = [8, 32], strides = [1, 1]} : vector<8x128xf32> to vector<8x32xf32>
    %115 = arith.mulf %108, %95 : vector<8x32xf32>
    %116 = arith.mulf %107, %113 : vector<8x32xf32>
    %117 = arith.addf %115, %116 : vector<8x32xf32>
    %118 = math.tanh %117 : vector<8x32xf32>
    %119 = arith.mulf %114, %118 : vector<8x32xf32>
    %120 = arith.truncf %119 : vector<8x32xf32> to vector<8x32xbf16>
    %cst_30 = arith.constant dense<0.000000e+00> : vector<8x128xf32>
    %121 = tpu.matmul %120, %3, %cst_30 {dimension_numbers = #tpu.dot_dimension_numbers<[1], [0], [0], [1], [0, 0, 1, 1], [], []>} : vector<8x32xbf16>, vector<32x128xbf16>, vector<8x128xf32> -> vector<8x128xf32>
    %122 = vector.extract_strided_slice %7 {offsets = [40, 0], sizes = [8, 128], strides = [1, 1]} : vector<64x128xf32> to vector<8x128xf32>
    %123 = arith.addf %121, %122 : vector<8x128xf32>
    %124 = arith.negf %123 : vector<8x128xf32>
    %125 = math.exp %124 : vector<8x128xf32>
    %cst_31 = arith.constant 1.000000e+00 : f32
    %126 = vector.broadcast %cst_31 : f32 to vector<8x128xf32>
    %127 = arith.addf %126, %125 : vector<8x128xf32>
    %128 = arith.divf %126, %127 : vector<8x128xf32>
    %129 = vector.extract_strided_slice %128 {offsets = [0, 0], sizes = [8, 32], strides = [1, 1]} : vector<8x128xf32> to vector<8x32xf32>
    %130 = vector.extract_strided_slice %128 {offsets = [0, 32], sizes = [8, 32], strides = [1, 1]} : vector<8x128xf32> to vector<8x32xf32>
    %131 = vector.extract_strided_slice %128 {offsets = [0, 64], sizes = [8, 32], strides = [1, 1]} : vector<8x128xf32> to vector<8x32xf32>
    %cst_32 = arith.constant 2.000000e+00 : f32
    %132 = vector.broadcast %cst_32 : f32 to vector<8x32xf32>
    %133 = arith.mulf %132, %131 : vector<8x32xf32>
    %cst_33 = arith.constant 1.000000e+00 : f32
    %134 = vector.broadcast %cst_33 : f32 to vector<8x32xf32>
    %135 = arith.subf %133, %134 : vector<8x32xf32>
    %136 = vector.extract_strided_slice %128 {offsets = [0, 96], sizes = [8, 32], strides = [1, 1]} : vector<8x128xf32> to vector<8x32xf32>
    %137 = arith.mulf %130, %117 : vector<8x32xf32>
    %138 = arith.mulf %129, %135 : vector<8x32xf32>
    %139 = arith.addf %137, %138 : vector<8x32xf32>
    %140 = math.tanh %139 : vector<8x32xf32>
    %141 = arith.mulf %136, %140 : vector<8x32xf32>
    %142 = arith.truncf %141 : vector<8x32xf32> to vector<8x32xbf16>
    %cst_34 = arith.constant dense<0.000000e+00> : vector<8x128xf32>
    %143 = tpu.matmul %142, %3, %cst_34 {dimension_numbers = #tpu.dot_dimension_numbers<[1], [0], [0], [1], [0, 0, 1, 1], [], []>} : vector<8x32xbf16>, vector<32x128xbf16>, vector<8x128xf32> -> vector<8x128xf32>
    %144 = vector.extract_strided_slice %7 {offsets = [48, 0], sizes = [8, 128], strides = [1, 1]} : vector<64x128xf32> to vector<8x128xf32>
    %145 = arith.addf %143, %144 : vector<8x128xf32>
    %146 = arith.negf %145 : vector<8x128xf32>
    %147 = math.exp %146 : vector<8x128xf32>
    %cst_35 = arith.constant 1.000000e+00 : f32
    %148 = vector.broadcast %cst_35 : f32 to vector<8x128xf32>
    %149 = arith.addf %148, %147 : vector<8x128xf32>
    %150 = arith.divf %148, %149 : vector<8x128xf32>
    %151 = vector.extract_strided_slice %150 {offsets = [0, 0], sizes = [8, 32], strides = [1, 1]} : vector<8x128xf32> to vector<8x32xf32>
    %152 = vector.extract_strided_slice %150 {offsets = [0, 32], sizes = [8, 32], strides = [1, 1]} : vector<8x128xf32> to vector<8x32xf32>
    %153 = vector.extract_strided_slice %150 {offsets = [0, 64], sizes = [8, 32], strides = [1, 1]} : vector<8x128xf32> to vector<8x32xf32>
    %cst_36 = arith.constant 2.000000e+00 : f32
    %154 = vector.broadcast %cst_36 : f32 to vector<8x32xf32>
    %155 = arith.mulf %154, %153 : vector<8x32xf32>
    %cst_37 = arith.constant 1.000000e+00 : f32
    %156 = vector.broadcast %cst_37 : f32 to vector<8x32xf32>
    %157 = arith.subf %155, %156 : vector<8x32xf32>
    %158 = vector.extract_strided_slice %150 {offsets = [0, 96], sizes = [8, 32], strides = [1, 1]} : vector<8x128xf32> to vector<8x32xf32>
    %159 = arith.mulf %152, %139 : vector<8x32xf32>
    %160 = arith.mulf %151, %157 : vector<8x32xf32>
    %161 = arith.addf %159, %160 : vector<8x32xf32>
    %162 = math.tanh %161 : vector<8x32xf32>
    %163 = arith.mulf %158, %162 : vector<8x32xf32>
    %164 = arith.truncf %163 : vector<8x32xf32> to vector<8x32xbf16>
    %cst_38 = arith.constant dense<0.000000e+00> : vector<8x128xf32>
    %165 = tpu.matmul %164, %3, %cst_38 {dimension_numbers = #tpu.dot_dimension_numbers<[1], [0], [0], [1], [0, 0, 1, 1], [], []>} : vector<8x32xbf16>, vector<32x128xbf16>, vector<8x128xf32> -> vector<8x128xf32>
    %166 = vector.extract_strided_slice %7 {offsets = [56, 0], sizes = [8, 128], strides = [1, 1]} : vector<64x128xf32> to vector<8x128xf32>
    %167 = arith.addf %165, %166 : vector<8x128xf32>
    %168 = arith.negf %167 : vector<8x128xf32>
    %169 = math.exp %168 : vector<8x128xf32>
    %cst_39 = arith.constant 1.000000e+00 : f32
    %170 = vector.broadcast %cst_39 : f32 to vector<8x128xf32>
    %171 = arith.addf %170, %169 : vector<8x128xf32>
    %172 = arith.divf %170, %171 : vector<8x128xf32>
    %173 = vector.extract_strided_slice %172 {offsets = [0, 0], sizes = [8, 32], strides = [1, 1]} : vector<8x128xf32> to vector<8x32xf32>
    %174 = vector.extract_strided_slice %172 {offsets = [0, 32], sizes = [8, 32], strides = [1, 1]} : vector<8x128xf32> to vector<8x32xf32>
    %175 = vector.extract_strided_slice %172 {offsets = [0, 64], sizes = [8, 32], strides = [1, 1]} : vector<8x128xf32> to vector<8x32xf32>
    %cst_40 = arith.constant 2.000000e+00 : f32
    %176 = vector.broadcast %cst_40 : f32 to vector<8x32xf32>
    %177 = arith.mulf %176, %175 : vector<8x32xf32>
    %cst_41 = arith.constant 1.000000e+00 : f32
    %178 = vector.broadcast %cst_41 : f32 to vector<8x32xf32>
    %179 = arith.subf %177, %178 : vector<8x32xf32>
    %180 = vector.extract_strided_slice %172 {offsets = [0, 96], sizes = [8, 32], strides = [1, 1]} : vector<8x128xf32> to vector<8x32xf32>
    %181 = arith.mulf %174, %161 : vector<8x32xf32>
    %182 = arith.mulf %173, %179 : vector<8x32xf32>
    %183 = arith.addf %181, %182 : vector<8x32xf32>
    %184 = math.tanh %183 : vector<8x32xf32>
    %185 = arith.mulf %180, %184 : vector<8x32xf32>
    %186 = tpu.concatenate %31, %53, %75, %97, %119, %141, %163, %185 in 0 : vector<8x32xf32>, vector<8x32xf32>, vector<8x32xf32>, vector<8x32xf32>, vector<8x32xf32>, vector<8x32xf32>, vector<8x32xf32>, vector<8x32xf32> -> vector<64x32xf32>
    %187 = arith.truncf %186 : vector<64x32xf32> to vector<64x32xbf16>
    %c0_42 = arith.constant 0 : index
    %c0_43 = arith.constant 0 : index
    %188 = vector.load %arg4[%c0_42, %c0_43] : memref<32x128xbf16, #tpu.memory_space<vmem>>, vector<32x128xbf16>
    %c0_44 = arith.constant 0 : index
    %c0_45 = arith.constant 0 : index
    %189 = vector.load %arg5[%c0_44, %c0_45] : memref<32x128xbf16, #tpu.memory_space<vmem>>, vector<32x128xbf16>
    %c0_46 = arith.constant 0 : index
    %c0_47 = arith.constant 0 : index
    %190 = vector.load %arg6[%c0_46, %c0_47] : memref<1x128xf32, #tpu.memory_space<vmem>>, vector<1x128xf32>
    %cst_48 = arith.constant dense<0.000000e+00> : vector<64x128xf32>
    %191 = tpu.matmul %187, %188, %cst_48 {dimension_numbers = #tpu.dot_dimension_numbers<[1], [0], [0], [1], [0, 0, 1, 1], [], []>} : vector<64x32xbf16>, vector<32x128xbf16>, vector<64x128xf32> -> vector<64x128xf32>
    %192 = vector.broadcast %190 : vector<1x128xf32> to vector<64x128xf32>
    %193 = arith.addf %191, %192 : vector<64x128xf32>
    %cst_49 = arith.constant 0.000000e+00 : f32
    %194 = vector.broadcast %cst_49 : f32 to vector<8x32xf32>
    %cst_50 = arith.constant 0.000000e+00 : f32
    %195 = vector.broadcast %cst_50 : f32 to vector<8x32xf32>
    %196 = arith.truncf %194 : vector<8x32xf32> to vector<8x32xbf16>
    %cst_51 = arith.constant dense<0.000000e+00> : vector<8x128xf32>
    %197 = tpu.matmul %196, %189, %cst_51 {dimension_numbers = #tpu.dot_dimension_numbers<[1], [0], [0], [1], [0, 0, 1, 1], [], []>} : vector<8x32xbf16>, vector<32x128xbf16>, vector<8x128xf32> -> vector<8x128xf32>
    %198 = vector.extract_strided_slice %193 {offsets = [0, 0], sizes = [8, 128], strides = [1, 1]} : vector<64x128xf32> to vector<8x128xf32>
    %199 = arith.addf %197, %198 : vector<8x128xf32>
    %200 = arith.negf %199 : vector<8x128xf32>
    %201 = math.exp %200 : vector<8x128xf32>
    %cst_52 = arith.constant 1.000000e+00 : f32
    %202 = vector.broadcast %cst_52 : f32 to vector<8x128xf32>
    %203 = arith.addf %202, %201 : vector<8x128xf32>
    %204 = arith.divf %202, %203 : vector<8x128xf32>
    %205 = vector.extract_strided_slice %204 {offsets = [0, 0], sizes = [8, 32], strides = [1, 1]} : vector<8x128xf32> to vector<8x32xf32>
    %206 = vector.extract_strided_slice %204 {offsets = [0, 32], sizes = [8, 32], strides = [1, 1]} : vector<8x128xf32> to vector<8x32xf32>
    %207 = vector.extract_strided_slice %204 {offsets = [0, 64], sizes = [8, 32], strides = [1, 1]} : vector<8x128xf32> to vector<8x32xf32>
    %cst_53 = arith.constant 2.000000e+00 : f32
    %208 = vector.broadcast %cst_53 : f32 to vector<8x32xf32>
    %209 = arith.mulf %208, %207 : vector<8x32xf32>
    %cst_54 = arith.constant 1.000000e+00 : f32
    %210 = vector.broadcast %cst_54 : f32 to vector<8x32xf32>
    %211 = arith.subf %209, %210 : vector<8x32xf32>
    %212 = vector.extract_strided_slice %204 {offsets = [0, 96], sizes = [8, 32], strides = [1, 1]} : vector<8x128xf32> to vector<8x32xf32>
    %213 = arith.mulf %206, %195 : vector<8x32xf32>
    %214 = arith.mulf %205, %211 : vector<8x32xf32>
    %215 = arith.addf %213, %214 : vector<8x32xf32>
    %216 = math.tanh %215 : vector<8x32xf32>
    %217 = arith.mulf %212, %216 : vector<8x32xf32>
    %218 = arith.truncf %217 : vector<8x32xf32> to vector<8x32xbf16>
    %cst_55 = arith.constant dense<0.000000e+00> : vector<8x128xf32>
    %219 = tpu.matmul %218, %189, %cst_55 {dimension_numbers = #tpu.dot_dimension_numbers<[1], [0], [0], [1], [0, 0, 1, 1], [], []>} : vector<8x32xbf16>, vector<32x128xbf16>, vector<8x128xf32> -> vector<8x128xf32>
    %220 = vector.extract_strided_slice %193 {offsets = [8, 0], sizes = [8, 128], strides = [1, 1]} : vector<64x128xf32> to vector<8x128xf32>
    %221 = arith.addf %219, %220 : vector<8x128xf32>
    %222 = arith.negf %221 : vector<8x128xf32>
    %223 = math.exp %222 : vector<8x128xf32>
    %cst_56 = arith.constant 1.000000e+00 : f32
    %224 = vector.broadcast %cst_56 : f32 to vector<8x128xf32>
    %225 = arith.addf %224, %223 : vector<8x128xf32>
    %226 = arith.divf %224, %225 : vector<8x128xf32>
    %227 = vector.extract_strided_slice %226 {offsets = [0, 0], sizes = [8, 32], strides = [1, 1]} : vector<8x128xf32> to vector<8x32xf32>
    %228 = vector.extract_strided_slice %226 {offsets = [0, 32], sizes = [8, 32], strides = [1, 1]} : vector<8x128xf32> to vector<8x32xf32>
    %229 = vector.extract_strided_slice %226 {offsets = [0, 64], sizes = [8, 32], strides = [1, 1]} : vector<8x128xf32> to vector<8x32xf32>
    %cst_57 = arith.constant 2.000000e+00 : f32
    %230 = vector.broadcast %cst_57 : f32 to vector<8x32xf32>
    %231 = arith.mulf %230, %229 : vector<8x32xf32>
    %cst_58 = arith.constant 1.000000e+00 : f32
    %232 = vector.broadcast %cst_58 : f32 to vector<8x32xf32>
    %233 = arith.subf %231, %232 : vector<8x32xf32>
    %234 = vector.extract_strided_slice %226 {offsets = [0, 96], sizes = [8, 32], strides = [1, 1]} : vector<8x128xf32> to vector<8x32xf32>
    %235 = arith.mulf %228, %215 : vector<8x32xf32>
    %236 = arith.mulf %227, %233 : vector<8x32xf32>
    %237 = arith.addf %235, %236 : vector<8x32xf32>
    %238 = math.tanh %237 : vector<8x32xf32>
    %239 = arith.mulf %234, %238 : vector<8x32xf32>
    %240 = arith.truncf %239 : vector<8x32xf32> to vector<8x32xbf16>
    %cst_59 = arith.constant dense<0.000000e+00> : vector<8x128xf32>
    %241 = tpu.matmul %240, %189, %cst_59 {dimension_numbers = #tpu.dot_dimension_numbers<[1], [0], [0], [1], [0, 0, 1, 1], [], []>} : vector<8x32xbf16>, vector<32x128xbf16>, vector<8x128xf32> -> vector<8x128xf32>
    %242 = vector.extract_strided_slice %193 {offsets = [16, 0], sizes = [8, 128], strides = [1, 1]} : vector<64x128xf32> to vector<8x128xf32>
    %243 = arith.addf %241, %242 : vector<8x128xf32>
    %244 = arith.negf %243 : vector<8x128xf32>
    %245 = math.exp %244 : vector<8x128xf32>
    %cst_60 = arith.constant 1.000000e+00 : f32
    %246 = vector.broadcast %cst_60 : f32 to vector<8x128xf32>
    %247 = arith.addf %246, %245 : vector<8x128xf32>
    %248 = arith.divf %246, %247 : vector<8x128xf32>
    %249 = vector.extract_strided_slice %248 {offsets = [0, 0], sizes = [8, 32], strides = [1, 1]} : vector<8x128xf32> to vector<8x32xf32>
    %250 = vector.extract_strided_slice %248 {offsets = [0, 32], sizes = [8, 32], strides = [1, 1]} : vector<8x128xf32> to vector<8x32xf32>
    %251 = vector.extract_strided_slice %248 {offsets = [0, 64], sizes = [8, 32], strides = [1, 1]} : vector<8x128xf32> to vector<8x32xf32>
    %cst_61 = arith.constant 2.000000e+00 : f32
    %252 = vector.broadcast %cst_61 : f32 to vector<8x32xf32>
    %253 = arith.mulf %252, %251 : vector<8x32xf32>
    %cst_62 = arith.constant 1.000000e+00 : f32
    %254 = vector.broadcast %cst_62 : f32 to vector<8x32xf32>
    %255 = arith.subf %253, %254 : vector<8x32xf32>
    %256 = vector.extract_strided_slice %248 {offsets = [0, 96], sizes = [8, 32], strides = [1, 1]} : vector<8x128xf32> to vector<8x32xf32>
    %257 = arith.mulf %250, %237 : vector<8x32xf32>
    %258 = arith.mulf %249, %255 : vector<8x32xf32>
    %259 = arith.addf %257, %258 : vector<8x32xf32>
    %260 = math.tanh %259 : vector<8x32xf32>
    %261 = arith.mulf %256, %260 : vector<8x32xf32>
    %262 = arith.truncf %261 : vector<8x32xf32> to vector<8x32xbf16>
    %cst_63 = arith.constant dense<0.000000e+00> : vector<8x128xf32>
    %263 = tpu.matmul %262, %189, %cst_63 {dimension_numbers = #tpu.dot_dimension_numbers<[1], [0], [0], [1], [0, 0, 1, 1], [], []>} : vector<8x32xbf16>, vector<32x128xbf16>, vector<8x128xf32> -> vector<8x128xf32>
    %264 = vector.extract_strided_slice %193 {offsets = [24, 0], sizes = [8, 128], strides = [1, 1]} : vector<64x128xf32> to vector<8x128xf32>
    %265 = arith.addf %263, %264 : vector<8x128xf32>
    %266 = arith.negf %265 : vector<8x128xf32>
    %267 = math.exp %266 : vector<8x128xf32>
    %cst_64 = arith.constant 1.000000e+00 : f32
    %268 = vector.broadcast %cst_64 : f32 to vector<8x128xf32>
    %269 = arith.addf %268, %267 : vector<8x128xf32>
    %270 = arith.divf %268, %269 : vector<8x128xf32>
    %271 = vector.extract_strided_slice %270 {offsets = [0, 0], sizes = [8, 32], strides = [1, 1]} : vector<8x128xf32> to vector<8x32xf32>
    %272 = vector.extract_strided_slice %270 {offsets = [0, 32], sizes = [8, 32], strides = [1, 1]} : vector<8x128xf32> to vector<8x32xf32>
    %273 = vector.extract_strided_slice %270 {offsets = [0, 64], sizes = [8, 32], strides = [1, 1]} : vector<8x128xf32> to vector<8x32xf32>
    %cst_65 = arith.constant 2.000000e+00 : f32
    %274 = vector.broadcast %cst_65 : f32 to vector<8x32xf32>
    %275 = arith.mulf %274, %273 : vector<8x32xf32>
    %cst_66 = arith.constant 1.000000e+00 : f32
    %276 = vector.broadcast %cst_66 : f32 to vector<8x32xf32>
    %277 = arith.subf %275, %276 : vector<8x32xf32>
    %278 = vector.extract_strided_slice %270 {offsets = [0, 96], sizes = [8, 32], strides = [1, 1]} : vector<8x128xf32> to vector<8x32xf32>
    %279 = arith.mulf %272, %259 : vector<8x32xf32>
    %280 = arith.mulf %271, %277 : vector<8x32xf32>
    %281 = arith.addf %279, %280 : vector<8x32xf32>
    %282 = math.tanh %281 : vector<8x32xf32>
    %283 = arith.mulf %278, %282 : vector<8x32xf32>
    %284 = arith.truncf %283 : vector<8x32xf32> to vector<8x32xbf16>
    %cst_67 = arith.constant dense<0.000000e+00> : vector<8x128xf32>
    %285 = tpu.matmul %284, %189, %cst_67 {dimension_numbers = #tpu.dot_dimension_numbers<[1], [0], [0], [1], [0, 0, 1, 1], [], []>} : vector<8x32xbf16>, vector<32x128xbf16>, vector<8x128xf32> -> vector<8x128xf32>
    %286 = vector.extract_strided_slice %193 {offsets = [32, 0], sizes = [8, 128], strides = [1, 1]} : vector<64x128xf32> to vector<8x128xf32>
    %287 = arith.addf %285, %286 : vector<8x128xf32>
    %288 = arith.negf %287 : vector<8x128xf32>
    %289 = math.exp %288 : vector<8x128xf32>
    %cst_68 = arith.constant 1.000000e+00 : f32
    %290 = vector.broadcast %cst_68 : f32 to vector<8x128xf32>
    %291 = arith.addf %290, %289 : vector<8x128xf32>
    %292 = arith.divf %290, %291 : vector<8x128xf32>
    %293 = vector.extract_strided_slice %292 {offsets = [0, 0], sizes = [8, 32], strides = [1, 1]} : vector<8x128xf32> to vector<8x32xf32>
    %294 = vector.extract_strided_slice %292 {offsets = [0, 32], sizes = [8, 32], strides = [1, 1]} : vector<8x128xf32> to vector<8x32xf32>
    %295 = vector.extract_strided_slice %292 {offsets = [0, 64], sizes = [8, 32], strides = [1, 1]} : vector<8x128xf32> to vector<8x32xf32>
    %cst_69 = arith.constant 2.000000e+00 : f32
    %296 = vector.broadcast %cst_69 : f32 to vector<8x32xf32>
    %297 = arith.mulf %296, %295 : vector<8x32xf32>
    %cst_70 = arith.constant 1.000000e+00 : f32
    %298 = vector.broadcast %cst_70 : f32 to vector<8x32xf32>
    %299 = arith.subf %297, %298 : vector<8x32xf32>
    %300 = vector.extract_strided_slice %292 {offsets = [0, 96], sizes = [8, 32], strides = [1, 1]} : vector<8x128xf32> to vector<8x32xf32>
    %301 = arith.mulf %294, %281 : vector<8x32xf32>
    %302 = arith.mulf %293, %299 : vector<8x32xf32>
    %303 = arith.addf %301, %302 : vector<8x32xf32>
    %304 = math.tanh %303 : vector<8x32xf32>
    %305 = arith.mulf %300, %304 : vector<8x32xf32>
    %306 = arith.truncf %305 : vector<8x32xf32> to vector<8x32xbf16>
    %cst_71 = arith.constant dense<0.000000e+00> : vector<8x128xf32>
    %307 = tpu.matmul %306, %189, %cst_71 {dimension_numbers = #tpu.dot_dimension_numbers<[1], [0], [0], [1], [0, 0, 1, 1], [], []>} : vector<8x32xbf16>, vector<32x128xbf16>, vector<8x128xf32> -> vector<8x128xf32>
    %308 = vector.extract_strided_slice %193 {offsets = [40, 0], sizes = [8, 128], strides = [1, 1]} : vector<64x128xf32> to vector<8x128xf32>
    %309 = arith.addf %307, %308 : vector<8x128xf32>
    %310 = arith.negf %309 : vector<8x128xf32>
    %311 = math.exp %310 : vector<8x128xf32>
    %cst_72 = arith.constant 1.000000e+00 : f32
    %312 = vector.broadcast %cst_72 : f32 to vector<8x128xf32>
    %313 = arith.addf %312, %311 : vector<8x128xf32>
    %314 = arith.divf %312, %313 : vector<8x128xf32>
    %315 = vector.extract_strided_slice %314 {offsets = [0, 0], sizes = [8, 32], strides = [1, 1]} : vector<8x128xf32> to vector<8x32xf32>
    %316 = vector.extract_strided_slice %314 {offsets = [0, 32], sizes = [8, 32], strides = [1, 1]} : vector<8x128xf32> to vector<8x32xf32>
    %317 = vector.extract_strided_slice %314 {offsets = [0, 64], sizes = [8, 32], strides = [1, 1]} : vector<8x128xf32> to vector<8x32xf32>
    %cst_73 = arith.constant 2.000000e+00 : f32
    %318 = vector.broadcast %cst_73 : f32 to vector<8x32xf32>
    %319 = arith.mulf %318, %317 : vector<8x32xf32>
    %cst_74 = arith.constant 1.000000e+00 : f32
    %320 = vector.broadcast %cst_74 : f32 to vector<8x32xf32>
    %321 = arith.subf %319, %320 : vector<8x32xf32>
    %322 = vector.extract_strided_slice %314 {offsets = [0, 96], sizes = [8, 32], strides = [1, 1]} : vector<8x128xf32> to vector<8x32xf32>
    %323 = arith.mulf %316, %303 : vector<8x32xf32>
    %324 = arith.mulf %315, %321 : vector<8x32xf32>
    %325 = arith.addf %323, %324 : vector<8x32xf32>
    %326 = math.tanh %325 : vector<8x32xf32>
    %327 = arith.mulf %322, %326 : vector<8x32xf32>
    %328 = arith.truncf %327 : vector<8x32xf32> to vector<8x32xbf16>
    %cst_75 = arith.constant dense<0.000000e+00> : vector<8x128xf32>
    %329 = tpu.matmul %328, %189, %cst_75 {dimension_numbers = #tpu.dot_dimension_numbers<[1], [0], [0], [1], [0, 0, 1, 1], [], []>} : vector<8x32xbf16>, vector<32x128xbf16>, vector<8x128xf32> -> vector<8x128xf32>
    %330 = vector.extract_strided_slice %193 {offsets = [48, 0], sizes = [8, 128], strides = [1, 1]} : vector<64x128xf32> to vector<8x128xf32>
    %331 = arith.addf %329, %330 : vector<8x128xf32>
    %332 = arith.negf %331 : vector<8x128xf32>
    %333 = math.exp %332 : vector<8x128xf32>
    %cst_76 = arith.constant 1.000000e+00 : f32
    %334 = vector.broadcast %cst_76 : f32 to vector<8x128xf32>
    %335 = arith.addf %334, %333 : vector<8x128xf32>
    %336 = arith.divf %334, %335 : vector<8x128xf32>
    %337 = vector.extract_strided_slice %336 {offsets = [0, 0], sizes = [8, 32], strides = [1, 1]} : vector<8x128xf32> to vector<8x32xf32>
    %338 = vector.extract_strided_slice %336 {offsets = [0, 32], sizes = [8, 32], strides = [1, 1]} : vector<8x128xf32> to vector<8x32xf32>
    %339 = vector.extract_strided_slice %336 {offsets = [0, 64], sizes = [8, 32], strides = [1, 1]} : vector<8x128xf32> to vector<8x32xf32>
    %cst_77 = arith.constant 2.000000e+00 : f32
    %340 = vector.broadcast %cst_77 : f32 to vector<8x32xf32>
    %341 = arith.mulf %340, %339 : vector<8x32xf32>
    %cst_78 = arith.constant 1.000000e+00 : f32
    %342 = vector.broadcast %cst_78 : f32 to vector<8x32xf32>
    %343 = arith.subf %341, %342 : vector<8x32xf32>
    %344 = vector.extract_strided_slice %336 {offsets = [0, 96], sizes = [8, 32], strides = [1, 1]} : vector<8x128xf32> to vector<8x32xf32>
    %345 = arith.mulf %338, %325 : vector<8x32xf32>
    %346 = arith.mulf %337, %343 : vector<8x32xf32>
    %347 = arith.addf %345, %346 : vector<8x32xf32>
    %348 = math.tanh %347 : vector<8x32xf32>
    %349 = arith.mulf %344, %348 : vector<8x32xf32>
    %350 = arith.truncf %349 : vector<8x32xf32> to vector<8x32xbf16>
    %cst_79 = arith.constant dense<0.000000e+00> : vector<8x128xf32>
    %351 = tpu.matmul %350, %189, %cst_79 {dimension_numbers = #tpu.dot_dimension_numbers<[1], [0], [0], [1], [0, 0, 1, 1], [], []>} : vector<8x32xbf16>, vector<32x128xbf16>, vector<8x128xf32> -> vector<8x128xf32>
    %352 = vector.extract_strided_slice %193 {offsets = [56, 0], sizes = [8, 128], strides = [1, 1]} : vector<64x128xf32> to vector<8x128xf32>
    %353 = arith.addf %351, %352 : vector<8x128xf32>
    %354 = arith.negf %353 : vector<8x128xf32>
    %355 = math.exp %354 : vector<8x128xf32>
    %cst_80 = arith.constant 1.000000e+00 : f32
    %356 = vector.broadcast %cst_80 : f32 to vector<8x128xf32>
    %357 = arith.addf %356, %355 : vector<8x128xf32>
    %358 = arith.divf %356, %357 : vector<8x128xf32>
    %359 = vector.extract_strided_slice %358 {offsets = [0, 0], sizes = [8, 32], strides = [1, 1]} : vector<8x128xf32> to vector<8x32xf32>
    %360 = vector.extract_strided_slice %358 {offsets = [0, 32], sizes = [8, 32], strides = [1, 1]} : vector<8x128xf32> to vector<8x32xf32>
    %361 = vector.extract_strided_slice %358 {offsets = [0, 64], sizes = [8, 32], strides = [1, 1]} : vector<8x128xf32> to vector<8x32xf32>
    %cst_81 = arith.constant 2.000000e+00 : f32
    %362 = vector.broadcast %cst_81 : f32 to vector<8x32xf32>
    %363 = arith.mulf %362, %361 : vector<8x32xf32>
    %cst_82 = arith.constant 1.000000e+00 : f32
    %364 = vector.broadcast %cst_82 : f32 to vector<8x32xf32>
    %365 = arith.subf %363, %364 : vector<8x32xf32>
    %366 = vector.extract_strided_slice %358 {offsets = [0, 96], sizes = [8, 32], strides = [1, 1]} : vector<8x128xf32> to vector<8x32xf32>
    %367 = arith.mulf %360, %347 : vector<8x32xf32>
    %368 = arith.mulf %359, %365 : vector<8x32xf32>
    %369 = arith.addf %367, %368 : vector<8x32xf32>
    %370 = math.tanh %369 : vector<8x32xf32>
    %371 = arith.mulf %366, %370 : vector<8x32xf32>
    %372 = arith.truncf %371 : vector<8x32xf32> to vector<8x32xbf16>
    %c0_83 = arith.constant 0 : index
    %c0_84 = arith.constant 0 : index
    %373 = vector.load %arg7[%c0_83, %c0_84] : memref<32x8xbf16, #tpu.memory_space<vmem>>, vector<32x8xbf16>
    %cst_85 = arith.constant dense<0.000000e+00> : vector<8x8xf32>
    %374 = tpu.matmul %372, %373, %cst_85 {dimension_numbers = #tpu.dot_dimension_numbers<[1], [0], [0], [1], [0, 0, 1, 1], [], []>} : vector<8x32xbf16>, vector<32x8xbf16>, vector<8x8xf32> -> vector<8x8xf32>
    %c0_86 = arith.constant 0 : index
    %c0_87 = arith.constant 0 : index
    %375 = vector.load %arg8[%c0_86, %c0_87] : memref<1x8xf32, #tpu.memory_space<vmem>>, vector<1x8xf32>
    %376 = vector.broadcast %375 : vector<1x8xf32> to vector<8x8xf32>
    %377 = arith.addf %374, %376 : vector<8x8xf32>
    %c0_88 = arith.constant 0 : index
    %c0_89 = arith.constant 0 : index
    %378 = vector.load %arg9[%c0_88, %c0_89] : memref<8x8xf32, #tpu.memory_space<vmem>>, vector<8x8xf32>
    tpu.vector_store %arg9[%c0_88, %c0_89], %377 {strides = array<i32>} : memref<8x8xf32, #tpu.memory_space<vmem>>, vector<8x8xf32>,
    return
  }
}

</mosaic_0001>

<llo_original>
// kernel: tpu_custom_call.1
$region0: #{tpu_custom_call.1}
  #allocation0 [shape = 'u32[]', space=smem, size = 0x4, offset = 0x4, fixed_abs, tag = 'smem constant byte address 0x4 - core index']
  #allocation1 [shape = 'u32[72,128]{1,0:T(1,128)}', space=vmem, size = 0x9000, scoped, tag = 'internal scratch']
  %s0 = inlined_call_operand.hbm [shape: bf16[8,8,16], index: 0, kind: input, shape index: {}]
  %s1 = inlined_call_operand.hbm [shape: bf16[16,128], index: 1, kind: input, shape index: {}]
  %s2 = inlined_call_operand.vmem [shape: bf16[32,128], index: 2, kind: input, shape index: {}]
  %s3 = inlined_call_operand.vmem [shape: f32[1,128], index: 3, kind: input, shape index: {}]
  %s4 = inlined_call_operand.hbm [shape: bf16[32,128], index: 4, kind: input, shape index: {}]
  %s5 = inlined_call_operand.hbm [shape: bf16[32,128], index: 5, kind: input, shape index: {}]
  %s6 = inlined_call_operand.vmem [shape: f32[1,128], index: 6, kind: input, shape index: {}]
  %s7 = inlined_call_operand.vmem [shape: bf16[32,8], index: 7, kind: input, shape index: {}]
  %s8 = inlined_call_operand.vmem [shape: f32[1,8], index: 8, kind: input, shape index: {}]
  %s9 = inlined_call_operand.hbm [shape: f32[8,8], index: 9, kind: output, shape index: {}]
  %s10 = sld [smem:[#allocation0]]
  $region62: #{tpu_custom_call.1} parent=0
    _
  %s12 = ssub.s32 1, %s10
  %s13 = scalar_select 0, %s12, %s10
  $region1: #{tpu_custom_call.1} parent=0
    #allocation2 [shape = 'u8[16384]{0}', space=vmem, size = 0x4000, scoped, tag = 'input window, operand 0, single buffered']
    #allocation3 [shape = 's32[1]{0}', space=sflag, size = 0x4, scoped, tag = 'scoped memory for tpu_custom_call.1']
    #allocation4 [shape = 's32[1]{0}', space=sflag, size = 0x4, scoped, tag = 'scoped memory for tpu_custom_call.1']
    #allocation5 [shape = 'u8[4096]{0}', space=vmem, size = 0x1000, scoped, tag = 'input window, operand 1, single buffered']
    #allocation6 [shape = 's32[1]{0}', space=sflag, size = 0x4, scoped, tag = 'scoped memory for tpu_custom_call.1']
    #allocation7 [shape = 'u8[8192]{0}', space=vmem, size = 0x2000, scoped, tag = 'input window, operand 4, single buffered']
    #allocation8 [shape = 'u8[8192]{0}', space=vmem, size = 0x2000, scoped, tag = 'input window, operand 5, single buffered']
    #allocation9 [shape = 's32[1]{0}', space=sflag, size = 0x4, scoped, tag = 'scoped memory for tpu_custom_call.1']
    #allocation10 [shape = 'u8[4096]{0}', space=vmem, size = 0x1000, scoped, tag = 'output window, operand 0, single buffered']
    %14 = vsyncpa [#allocation3], 0
    %15 = vsyncpa [#allocation6], 0
    %16 = vsyncpa [#allocation9], 0
    %17 = vsyncpa [#allocation4], 0
    // Predicated region
    $region2: #{tpu_custom_call.1} parent=1 // pred_check
      _
    $region3: #{tpu_custom_call.1} parent=1 // pred_check_branch
      %19 = sbr.rel (0) target = $region5
    $region4: #{tpu_custom_call.1} parent=1 // pred_region
      %21 = vsyncadd [#allocation3], 0
      %s22 = sshll.u32 %s0, 4
      %s23 = int_to_ptr.hbm [resolvable:$true] %s22
      %s24 = sshll.u32 [#allocation2], 4
      %s25 = int_to_ptr.vmem [resolvable:$true] %s24
      %30 = dma.hbm_to_vmem [thread:$0]  %s23, 512, %s25, [#allocation3], 64, 64, 4
    $region5: #{tpu_custom_call.1} parent=1 // pred_fallthru
      _
    // Predicated region
    $region6: #{tpu_custom_call.1} parent=1 // pred_check
      _
    $region7: #{tpu_custom_call.1} parent=1 // pred_check_branch
      %32 = sbr.rel (0) target = $region9
    $region8: #{tpu_custom_call.1} parent=1 // pred_region
      %34 = vsyncadd [#allocation6], 0
      %s35 = sshll.u32 %s1, 4
      %s36 = int_to_ptr.hbm [resolvable:$true] %s35
      %s37 = sshll.u32 [#allocation5], 4
      %s38 = int_to_ptr.vmem [resolvable:$true] %s37
      %43 = dma.hbm_to_vmem [thread:$0]  %s36, 128, %s38, [#allocation6], 64, 64, 4
    $region9: #{tpu_custom_call.1} parent=1 // pred_fallthru
      _
    // Predicated region
    $region10: #{tpu_custom_call.1} parent=1 // pred_check
      _
    $region11: #{tpu_custom_call.1} parent=1 // pred_check_branch
      %45 = sbr.rel (0) target = $region13
    $region12: #{tpu_custom_call.1} parent=1 // pred_region
      _
    $region13: #{tpu_custom_call.1} parent=1 // pred_fallthru
      _
    // Predicated region
    $region14: #{tpu_custom_call.1} parent=1 // pred_check
      _
    $region15: #{tpu_custom_call.1} parent=1 // pred_check_branch
      %47 = sbr.rel (0) target = $region17
    $region16: #{tpu_custom_call.1} parent=1 // pred_region
      _
    $region17: #{tpu_custom_call.1} parent=1 // pred_fallthru
      _
    // Predicated region
    $region18: #{tpu_custom_call.1} parent=1 // pred_check
      _
    $region19: #{tpu_custom_call.1} parent=1 // pred_check_branch
      %49 = sbr.rel (0) target = $region21
    $region20: #{tpu_custom_call.1} parent=1 // pred_region
      %51 = vsyncadd [#allocation6], 0
      %s52 = sshll.u32 %s4, 4
      %s53 = int_to_ptr.hbm [resolvable:$true] %s52
      %s54 = sshll.u32 [#allocation7], 4
      %s55 = int_to_ptr.vmem [resolvable:$true] %s54
      %60 = dma.hbm_to_vmem [thread:$0]  %s53, 256, %s55, [#allocation6], 64, 64, 4
    $region21: #{tpu_custom_call.1} parent=1 // pred_fallthru
      _
    // Predicated region
    $region22: #{tpu_custom_call.1} parent=1 // pred_check
      _
    $region23: #{tpu_custom_call.1} parent=1 // pred_check_branch
      %62 = sbr.rel (0) target = $region25
    $region24: #{tpu_custom_call.1} parent=1 // pred_region
      %64 = vsyncadd [#allocation9], 0
      %s65 = sshll.u32 %s5, 4
      %s66 = int_to_ptr.hbm [resolvable:$true] %s65
      %s67 = sshll.u32 [#allocation8], 4
      %s68 = int_to_ptr.vmem [resolvable:$true] %s67
      %73 = dma.hbm_to_vmem [thread:$0]  %s66, 256, %s68, [#allocation9], 64, 64, 4
    $region25: #{tpu_custom_call.1} parent=1 // pred_fallthru
      _
    // Predicated region
    $region26: #{tpu_custom_call.1} parent=1 // pred_check
      _
    $region27: #{tpu_custom_call.1} parent=1 // pred_check_branch
      %75 = sbr.rel (0) target = $region29
    $region28: #{tpu_custom_call.1} parent=1 // pred_region
      _
    $region29: #{tpu_custom_call.1} parent=1 // pred_fallthru
      _
    // Predicated region
    $region30: #{tpu_custom_call.1} parent=1 // pred_check
      _
    $region31: #{tpu_custom_call.1} parent=1 // pred_check_branch
      %77 = sbr.rel (0) target = $region33
    $region32: #{tpu_custom_call.1} parent=1 // pred_region
      _
    $region33: #{tpu_custom_call.1} parent=1 // pred_fallthru
      _
    // Predicated region
    $region34: #{tpu_custom_call.1} parent=1 // pred_check
      _
    $region35: #{tpu_custom_call.1} parent=1 // pred_check_branch
      %79 = sbr.rel (0) target = $region37
    $region36: #{tpu_custom_call.1} parent=1 // pred_region
      _
    $region37: #{tpu_custom_call.1} parent=1 // pred_fallthru
      _
    // Predicated region
    $region38: #{tpu_custom_call.1} parent=1 // pred_check
      _
    $region39: #{tpu_custom_call.1} parent=1 // pred_check_branch
      %81 = sbr.rel (0) target = $region41
    $region40: #{tpu_custom_call.1} parent=1 // pred_region
      %83 = dma.done [#allocation3], 512
    $region41: #{tpu_custom_call.1} parent=1 // pred_fallthru
      _
    // Predicated region
    $region42: #{tpu_custom_call.1} parent=1 // pred_check
      _
    $region43: #{tpu_custom_call.1} parent=1 // pred_check_branch
      %85 = sbr.rel (0) target = $region45
    $region44: #{tpu_custom_call.1} parent=1 // pred_region
      %87 = dma.done [#allocation6], 128
    $region45: #{tpu_custom_call.1} parent=1 // pred_fallthru
      _
    // Predicated region
    $region46: #{tpu_custom_call.1} parent=1 // pred_check
      _
    $region47: #{tpu_custom_call.1} parent=1 // pred_check_branch
      %89 = sbr.rel (0) target = $region49
    $region48: #{tpu_custom_call.1} parent=1 // pred_region
      %91 = dma.done [#allocation6], 256
    $region49: #{tpu_custom_call.1} parent=1 // pred_fallthru
      _
    // Predicated region
    $region50: #{tpu_custom_call.1} parent=1 // pred_check
      _
    $region51: #{tpu_custom_call.1} parent=1 // pred_check_branch
      %93 = sbr.rel (0) target = $region53
    $region52: #{tpu_custom_call.1} parent=1 // pred_region
      %95 = dma.done [#allocation9], 256
    $region53: #{tpu_custom_call.1} parent=1 // pred_fallthru
      _
    %v97 = vld [vmem:[#allocation2] sm:$0xf]
    %v98 = vld [vmem:[#allocation2 + $0x4] sm:$0xf]
    %v99 = vld [vmem:[#allocation2 + $0x8] sm:$0xf]
    %v100 = vld [vmem:[#allocation2 + $0xc] sm:$0xf]
    %v101 = vld [vmem:[#allocation2 + $0x10] sm:$0xf]
    %v102 = vld [vmem:[#allocation2 + $0x14] sm:$0xf]
    %v103 = vld [vmem:[#allocation2 + $0x18] sm:$0xf]
    %v104 = vld [vmem:[#allocation2 + $0x1c] sm:$0xf]
    %v105 = vld [vmem:[#allocation5] sm:$0xf]
    %v106 = vld [vmem:[#allocation5 + $0x4] sm:$0xf]
    %v107 = vld [vmem:[%s2] sm:$0xf]
    %v108 = vld [vmem:[%s2 + $0x4] sm:$0xf]
    %v109 = vld [vmem:[%s2 + $0x8] sm:$0xf]
    %v110 = vld [vmem:[%s2 + $0xc] sm:$0xf]
    %v111 = vld [vmem:[%s3] sm:$0x1]
    %v113 = vperm.slane %v111, 0
    %v123 = vunpack.c.l.b16 %v97
    %v124 = vunpack.c.l.b16 %v98
    %v125 = vunpack.c.l.b16 %v99
    %v126 = vunpack.c.l.b16 %v100
    %v127 = vunpack.c.l.b16 %v101
    %v128 = vunpack.c.l.b16 %v102
    %v129 = vunpack.c.l.b16 %v103
    %v130 = vunpack.c.l.b16 %v104
    %v131 = vpack.c.b16 %v124, %v123
    %v132 = vpack.c.b16 %v126, %v125
    %v133 = vpack.c.b16 %v128, %v127
    %v134 = vpack.c.b16 %v130, %v129
    %v137 = vunpack.c.l.b16 %v105
    %v138 = vunpack.c.l.b16 %v106
    %v139 = vpack.c.b16 %v138, %v137
    %vm141 = vcmask 130048
    %v143 = vsel %vm141, %v131, 0
    %v146 = vsel %vm141, %v132, 0
    %v149 = vsel %vm141, %v133, 0
    %v152 = vsel %vm141, %v134, 0
    %154 = vmatpush.bf16.msra.mxu0 0
    %155 = vmatpush.bf16.msra.mxu0 0
    %156 = vmatpush.bf16.msra.mxu0 0
    %157 = vmatpush.bf16.msra.mxu0 0
    %158 = vmatpush.bf16.msra.mxu0 0
    %159 = vmatpush.bf16.msra.mxu0 0
    %160 = vmatpush.bf16.msra.mxu0 0
    %161 = vmatpush.bf16.msra.mxu0 %v139
    %162 = vmatmul.bf16.gmra.mxu0 %v143
    %v163 = vpop.f32.mrf.mxu0
    %v164 = vadd.f32 %v113, %v163
    %v165 = vpop.f32.mrf.mxu0
    %v166 = vadd.f32 %v113, %v165
    %167 = vmatmul.bf16.gmra.mxu0 %v146
    %v168 = vpop.f32.mrf.mxu0
    %v169 = vadd.f32 %v113, %v168
    %v170 = vpop.f32.mrf.mxu0
    %v171 = vadd.f32 %v113, %v170
    %172 = vmatmul.bf16.gmra.mxu0 %v149
    %v173 = vpop.f32.mrf.mxu0
    %v174 = vadd.f32 %v113, %v173
    %v175 = vpop.f32.mrf.mxu0
    %v176 = vadd.f32 %v113, %v175
    %177 = vmatmul.bf16.gmra.mxu0 %v152
    %v178 = vpop.f32.mrf.mxu0
    %v179 = vadd.f32 %v113, %v178
    %v180 = vpop.f32.mrf.mxu0
    %v181 = vadd.f32 %v113, %v180
    %182 = vdwg.mxu0
    %v187 = vunpack.c.l.b16 %v107
    %v188 = vunpack.c.l.b16 %v108
    %v189 = vunpack.c.l.b16 %v109
    %v190 = vunpack.c.l.b16 %v110
    %v191 = vpack.c.b16 %v188, %v187
    %v192 = vpack.c.b16 %v190, %v189
    %vm195 = vcmask 261120
    %v197 = vsel %vm195, 0, 0
    %199 = vmatpush.bf16.msra.mxu0 0
    %200 = vmatpush.bf16.msra.mxu0 0
    %201 = vmatpush.bf16.msra.mxu0 0
    %202 = vmatpush.bf16.msra.mxu0 0
    %203 = vmatpush.bf16.msra.mxu0 0
    %204 = vmatpush.bf16.msra.mxu0 0
    %205 = vmatpush.bf16.msra.mxu0 %v192
    %206 = vmatpush.bf16.msra.mxu0 %v191
    %207 = vmatmul.bf16.gmra.mxu0 %v197
    %v208 = vpop.f32.mrf.mxu0
    %v209 = vadd.f32 %v164, %v208
    %v210 = vpop.f32.mrf.mxu0
    %211 = vdwg.mxu0
    %v212 = vxor.u32 %v209, 2147483648
    %v213 = vmul.f32 %v212, 1.442695
    %v214 = vpow.pop %v213
    %v215 = vadd.f32 %v214, 1.0
    %v216 = vrcp.pop %v215
    %v217 = vmul.f32 %v215, %v216
    %v218 = vsub.f32 1.0, %v217
    %v219 = vmul.f32 %v216, %v218
    %v220 = vadd.f32 %v216, %v219
    %vm221 = vweird.f32 %v215
    %vm222 = vweird.f32 %v216
    %vm223 = vmor %vm221, %vm222
    %v224 = vsel %vm223, %v216, %v220
    %v225 = vand.u32 2147483647, %v215
    %vm226 = vcmp.eq.f32.partialorder %v225, 8.507059e+37
    %v227 = vand.u32 %v215, 2147483648
    %v228 = vor.u32 1.1754944e-38, %v227
    %v229 = vsel %vm226, %v228, %v224
    %v230 = vmul.f32 1.0, %v229
    %v231 = vmul.f32 %v230, 2.0
    %v232 = vsub.f32 %v231, 1.0
    %v233 = vmul.f32 %v230, 0.0
    %235 = vrot.lane.b32.xlu0 %v232, 64
    %v236 = vpop.permute.xlu0 %235
    %v238 = vmul.f32 %v230, %v236
    %240 = vrot.lane.b32.xlu0 %v238, 32
    %v241 = vpop.permute.xlu0 %240
    %v243 = vadd.f32 %v233, %v241
    %v244 = vtanh.pop %v243
    %246 = vrot.lane.b32.xlu0 %v244, 64
    %v247 = vpop.permute.xlu0 %246
    %v249 = vmul.f32 %v230, %v247
    %v250 = vpack.c.bf16 %v249, %v249
    %252 = vrot.lane.b32.xlu0 %v250, 32
    %v253 = vpop.permute.xlu0 %252
    %v255 = vsel %vm195, %v253, 0
    %257 = vmatpush.bf16.msra.mxu0 0
    %258 = vmatpush.bf16.msra.mxu0 0
    %259 = vmatpush.bf16.msra.mxu0 0
    %260 = vmatpush.bf16.msra.mxu0 0
    %261 = vmatpush.bf16.msra.mxu0 0
    %262 = vmatpush.bf16.msra.mxu0 0
    %263 = vmatpush.bf16.msra.mxu0 %v192
    %264 = vmatpush.bf16.msra.mxu0 %v191
    %265 = vmatmul.bf16.gmra.mxu0 %v255
    %v266 = vpop.f32.mrf.mxu0
    %v267 = vadd.f32 %v166, %v266
    %v268 = vpop.f32.mrf.mxu0
    %269 = vdwg.mxu0
    %v270 = vxor.u32 %v267, 2147483648
    %v271 = vmul.f32 %v270, 1.442695
    %v272 = vpow.pop %v271
    %v273 = vadd.f32 %v272, 1.0
    %v274 = vrcp.pop %v273
    %v275 = vmul.f32 %v273, %v274
    %v276 = vsub.f32 1.0, %v275
    %v277 = vmul.f32 %v274, %v276
    %v278 = vadd.f32 %v274, %v277
    %vm279 = vweird.f32 %v273
    %vm280 = vweird.f32 %v274
    %vm281 = vmor %vm279, %vm280
    %v282 = vsel %vm281, %v274, %v278
    %v283 = vand.u32 2147483647, %v273
    %vm284 = vcmp.eq.f32.partialorder %v283, 8.507059e+37
    %v285 = vand.u32 %v273, 2147483648
    %v286 = vor.u32 1.1754944e-38, %v285
    %v287 = vsel %vm284, %v286, %v282
    %v288 = vmul.f32 1.0, %v287
    %v289 = vmul.f32 %v288, 2.0
    %v290 = vsub.f32 %v289, 1.0
    %v291 = vmul.f32 %v288, %v243
    %293 = vrot.lane.b32.xlu0 %v290, 64
    %v294 = vpop.permute.xlu0 %293
    %v296 = vmul.f32 %v288, %v294
    %298 = vrot.lane.b32.xlu0 %v296, 32
    %v299 = vpop.permute.xlu0 %298
    %v301 = vadd.f32 %v291, %v299
    %v302 = vtanh.pop %v301
    %304 = vrot.lane.b32.xlu0 %v302, 64
    %v305 = vpop.permute.xlu0 %304
    %v307 = vmul.f32 %v288, %v305
    %v308 = vpack.c.bf16 %v307, %v307
    %310 = vrot.lane.b32.xlu0 %v308, 32
    %v311 = vpop.permute.xlu0 %310
    %v313 = vsel %vm195, %v311, 0
    %315 = vmatpush.bf16.msra.mxu0 0
    %316 = vmatpush.bf16.msra.mxu0 0
    %317 = vmatpush.bf16.msra.mxu0 0
    %318 = vmatpush.bf16.msra.mxu0 0
    %319 = vmatpush.bf16.msra.mxu0 0
    %320 = vmatpush.bf16.msra.mxu0 0
    %321 = vmatpush.bf16.msra.mxu0 %v192
    %322 = vmatpush.bf16.msra.mxu0 %v191
    %323 = vmatmul.bf16.gmra.mxu0 %v313
    %v324 = vpop.f32.mrf.mxu0
    %v325 = vadd.f32 %v169, %v324
    %v326 = vpop.f32.mrf.mxu0
    %327 = vdwg.mxu0
    %v328 = vxor.u32 %v325, 2147483648
    %v329 = vmul.f32 %v328, 1.442695
    %v330 = vpow.pop %v329
    %v331 = vadd.f32 %v330, 1.0
    %v332 = vrcp.pop %v331
    %v333 = vmul.f32 %v331, %v332
    %v334 = vsub.f32 1.0, %v333
    %v335 = vmul.f32 %v332, %v334
    %v336 = vadd.f32 %v332, %v335
    %vm337 = vweird.f32 %v331
    %vm338 = vweird.f32 %v332
    %vm339 = vmor %vm337, %vm338
    %v340 = vsel %vm339, %v332, %v336
    %v341 = vand.u32 2147483647, %v331
    %vm342 = vcmp.eq.f32.partialorder %v341, 8.507059e+37
    %v343 = vand.u32 %v331, 2147483648
    %v344 = vor.u32 1.1754944e-38, %v343
    %v345 = vsel %vm342, %v344, %v340
    %v346 = vmul.f32 1.0, %v345
    %v347 = vmul.f32 %v346, 2.0
    %v348 = vsub.f32 %v347, 1.0
    %v349 = vmul.f32 %v346, %v301
    %351 = vrot.lane.b32.xlu0 %v348, 64
    %v352 = vpop.permute.xlu0 %351
    %v354 = vmul.f32 %v346, %v352
    %356 = vrot.lane.b32.xlu0 %v354, 32
    %v357 = vpop.permute.xlu0 %356
    %v359 = vadd.f32 %v349, %v357
    %v360 = vtanh.pop %v359
    %362 = vrot.lane.b32.xlu0 %v360, 64
    %v363 = vpop.permute.xlu0 %362
    %v365 = vmul.f32 %v346, %v363
    %v366 = vpack.c.bf16 %v365, %v365
    %368 = vrot.lane.b32.xlu0 %v366, 32
    %v369 = vpop.permute.xlu0 %368
    %v371 = vsel %vm195, %v369, 0
    %373 = vmatpush.bf16.msra.mxu0 0
    %374 = vmatpush.bf16.msra.mxu0 0
    %375 = vmatpush.bf16.msra.mxu0 0
    %376 = vmatpush.bf16.msra.mxu0 0
    %377 = vmatpush.bf16.msra.mxu0 0
    %378 = vmatpush.bf16.msra.mxu0 0
    %379 = vmatpush.bf16.msra.mxu0 %v192
    %380 = vmatpush.bf16.msra.mxu0 %v191
    %381 = vmatmul.bf16.gmra.mxu0 %v371
    %v382 = vpop.f32.mrf.mxu0
    %v383 = vadd.f32 %v171, %v382
    %v384 = vpop.f32.mrf.mxu0
    %385 = vdwg.mxu0
    %v386 = vxor.u32 %v383, 2147483648
    %v387 = vmul.f32 %v386, 1.442695
    %v388 = vpow.pop %v387
    %v389 = vadd.f32 %v388, 1.0
    %v390 = vrcp.pop %v389
    %v391 = vmul.f32 %v389, %v390
    %v392 = vsub.f32 1.0, %v391
    %v393 = vmul.f32 %v390, %v392
    %v394 = vadd.f32 %v390, %v393
    %vm395 = vweird.f32 %v389
    %vm396 = vweird.f32 %v390
    %vm397 = vmor %vm395, %vm396
    %v398 = vsel %vm397, %v390, %v394
    %v399 = vand.u32 2147483647, %v389
    %vm400 = vcmp.eq.f32.partialorder %v399, 8.507059e+37
    %v401 = vand.u32 %v389, 2147483648
    %v402 = vor.u32 1.1754944e-38, %v401
    %v403 = vsel %vm400, %v402, %v398
    %v404 = vmul.f32 1.0, %v403
    %v405 = vmul.f32 %v404, 2.0
    %v406 = vsub.f32 %v405, 1.0
    %v407 = vmul.f32 %v404, %v359
    %409 = vrot.lane.b32.xlu0 %v406, 64
    %v410 = vpop.permute.xlu0 %409
    %v412 = vmul.f32 %v404, %v410
    %414 = vrot.lane.b32.xlu0 %v412, 32
    %v415 = vpop.permute.xlu0 %414
    %v417 = vadd.f32 %v407, %v415
    %v418 = vtanh.pop %v417
    %420 = vrot.lane.b32.xlu0 %v418, 64
    %v421 = vpop.permute.xlu0 %420
    %v423 = vmul.f32 %v404, %v421
    %v424 = vpack.c.bf16 %v423, %v423
    %426 = vrot.lane.b32.xlu0 %v424, 32
    %v427 = vpop.permute.xlu0 %426
    %v429 = vsel %vm195, %v427, 0
    %431 = vmatpush.bf16.msra.mxu0 0
    %432 = vmatpush.bf16.msra.mxu0 0
    %433 = vmatpush.bf16.msra.mxu0 0
    %434 = vmatpush.bf16.msra.mxu0 0
    %435 = vmatpush.bf16.msra.mxu0 0
    %436 = vmatpush.bf16.msra.mxu0 0
    %437 = vmatpush.bf16.msra.mxu0 %v192
    %438 = vmatpush.bf16.msra.mxu0 %v191
    %439 = vmatmul.bf16.gmra.mxu0 %v429
    %v440 = vpop.f32.mrf.mxu0
    %v441 = vadd.f32 %v174, %v440
    %v442 = vpop.f32.mrf.mxu0
    %443 = vdwg.mxu0
    %v444 = vxor.u32 %v441, 2147483648
    %v445 = vmul.f32 %v444, 1.442695
    %v446 = vpow.pop %v445
    %v447 = vadd.f32 %v446, 1.0
    %v448 = vrcp.pop %v447
    %v449 = vmul.f32 %v447, %v448
    %v450 = vsub.f32 1.0, %v449
    %v451 = vmul.f32 %v448, %v450
    %v452 = vadd.f32 %v448, %v451
    %vm453 = vweird.f32 %v447
    %vm454 = vweird.f32 %v448
    %vm455 = vmor %vm453, %vm454
    %v456 = vsel %vm455, %v448, %v452
    %v457 = vand.u32 2147483647, %v447
    %vm458 = vcmp.eq.f32.partialorder %v457, 8.507059e+37
    %v459 = vand.u32 %v447, 2147483648
    %v460 = vor.u32 1.1754944e-38, %v459
    %v461 = vsel %vm458, %v460, %v456
    %v462 = vmul.f32 1.0, %v461
    %v463 = vmul.f32 %v462, 2.0
    %v464 = vsub.f32 %v463, 1.0
    %v465 = vmul.f32 %v462, %v417
    %467 = vrot.lane.b32.xlu0 %v464, 64
    %v468 = vpop.permute.xlu0 %467
    %v470 = vmul.f32 %v462, %v468
    %472 = vrot.lane.b32.xlu0 %v470, 32
    %v473 = vpop.permute.xlu0 %472
    %v475 = vadd.f32 %v465, %v473
    %v476 = vtanh.pop %v475
    %478 = vrot.lane.b32.xlu0 %v476, 64
    %v479 = vpop.permute.xlu0 %478
    %v481 = vmul.f32 %v462, %v479
    %v482 = vpack.c.bf16 %v481, %v481
    %484 = vrot.lane.b32.xlu0 %v482, 32
    %v485 = vpop.permute.xlu0 %484
    %v487 = vsel %vm195, %v485, 0
    %489 = vmatpush.bf16.msra.mxu0 0
    %490 = vmatpush.bf16.msra.mxu0 0
    %491 = vmatpush.bf16.msra.mxu0 0
    %492 = vmatpush.bf16.msra.mxu0 0
    %493 = vmatpush.bf16.msra.mxu0 0
    %494 = vmatpush.bf16.msra.mxu0 0
    %495 = vmatpush.bf16.msra.mxu0 %v192
    %496 = vmatpush.bf16.msra.mxu0 %v191
    %497 = vmatmul.bf16.gmra.mxu0 %v487
    %v498 = vpop.f32.mrf.mxu0
    %v499 = vadd.f32 %v176, %v498
    %v500 = vpop.f32.mrf.mxu0
    %501 = vdwg.mxu0
    %v502 = vxor.u32 %v499, 2147483648
    %v503 = vmul.f32 %v502, 1.442695
    %v504 = vpow.pop %v503
    %v505 = vadd.f32 %v504, 1.0
    %v506 = vrcp.pop %v505
    %v507 = vmul.f32 %v505, %v506
    %v508 = vsub.f32 1.0, %v507
    %v509 = vmul.f32 %v506, %v508
    %v510 = vadd.f32 %v506, %v509
    %vm511 = vweird.f32 %v505
    %vm512 = vweird.f32 %v506
    %vm513 = vmor %vm511, %vm512
    %v514 = vsel %vm513, %v506, %v510
    %v515 = vand.u32 2147483647, %v505
    %vm516 = vcmp.eq.f32.partialorder %v515, 8.507059e+37
    %v517 = vand.u32 %v505, 2147483648
    %v518 = vor.u32 1.1754944e-38, %v517
    %v519 = vsel %vm516, %v518, %v514
    %v520 = vmul.f32 1.0, %v519
    %v521 = vmul.f32 %v520, 2.0
    %v522 = vsub.f32 %v521, 1.0
    %v523 = vmul.f32 %v520, %v475
    %525 = vrot.lane.b32.xlu0 %v522, 64
    %v526 = vpop.permute.xlu0 %525
    %v528 = vmul.f32 %v520, %v526
    %530 = vrot.lane.b32.xlu0 %v528, 32
    %v531 = vpop.permute.xlu0 %530
    %v533 = vadd.f32 %v523, %v531
    %v534 = vtanh.pop %v533
    %536 = vrot.lane.b32.xlu0 %v534, 64
    %v537 = vpop.permute.xlu0 %536
    %v539 = vmul.f32 %v520, %v537
    %v540 = vpack.c.bf16 %v539, %v539
    %542 = vrot.lane.b32.xlu0 %v540, 32
    %v543 = vpop.permute.xlu0 %542
    %v545 = vsel %vm195, %v543, 0
    %547 = vmatpush.bf16.msra.mxu0 0
    %548 = vmatpush.bf16.msra.mxu0 0
    %549 = vmatpush.bf16.msra.mxu0 0
    %550 = vmatpush.bf16.msra.mxu0 0
    %551 = vmatpush.bf16.msra.mxu0 0
    %552 = vmatpush.bf16.msra.mxu0 0
    %553 = vmatpush.bf16.msra.mxu0 %v192
    %554 = vmatpush.bf16.msra.mxu0 %v191
    %555 = vmatmul.bf16.gmra.mxu0 %v545
    %v556 = vpop.f32.mrf.mxu0
    %v557 = vadd.f32 %v179, %v556
    %v558 = vpop.f32.mrf.mxu0
    %559 = vdwg.mxu0
    %v560 = vxor.u32 %v557, 2147483648
    %v561 = vmul.f32 %v560, 1.442695
    %v562 = vpow.pop %v561
    %v563 = vadd.f32 %v562, 1.0
    %v564 = vrcp.pop %v563
    %v565 = vmul.f32 %v563, %v564
    %v566 = vsub.f32 1.0, %v565
    %v567 = vmul.f32 %v564, %v566
    %v568 = vadd.f32 %v564, %v567
    %vm569 = vweird.f32 %v563
    %vm570 = vweird.f32 %v564
    %vm571 = vmor %vm569, %vm570
    %v572 = vsel %vm571, %v564, %v568
    %v573 = vand.u32 2147483647, %v563
    %vm574 = vcmp.eq.f32.partialorder %v573, 8.507059e+37
    %v575 = vand.u32 %v563, 2147483648
    %v576 = vor.u32 1.1754944e-38, %v575
    %v577 = vsel %vm574, %v576, %v572
    %v578 = vmul.f32 1.0, %v577
    %v579 = vmul.f32 %v578, 2.0
    %v580 = vsub.f32 %v579, 1.0
    %v581 = vmul.f32 %v578, %v533
    %583 = vrot.lane.b32.xlu0 %v580, 64
    %v584 = vpop.permute.xlu0 %583
    %v586 = vmul.f32 %v578, %v584
    %588 = vrot.lane.b32.xlu0 %v586, 32
    %v589 = vpop.permute.xlu0 %588
    %v591 = vadd.f32 %v581, %v589
    %v592 = vtanh.pop %v591
    %594 = vrot.lane.b32.xlu0 %v592, 64
    %v595 = vpop.permute.xlu0 %594
    %v597 = vmul.f32 %v578, %v595
    %v598 = vpack.c.bf16 %v597, %v597
    %600 = vrot.lane.b32.xlu0 %v598, 32
    %v601 = vpop.permute.xlu0 %600
    %v603 = vsel %vm195, %v601, 0
    %605 = vmatpush.bf16.msra.mxu0 0
    %606 = vmatpush.bf16.msra.mxu0 0
    %607 = vmatpush.bf16.msra.mxu0 0
    %608 = vmatpush.bf16.msra.mxu0 0
    %609 = vmatpush.bf16.msra.mxu0 0
    %610 = vmatpush.bf16.msra.mxu0 0
    %611 = vmatpush.bf16.msra.mxu0 %v192
    %612 = vmatpush.bf16.msra.mxu0 %v191
    %613 = vmatmul.bf16.gmra.mxu0 %v603
    %v614 = vpop.f32.mrf.mxu0
    %v615 = vadd.f32 %v181, %v614
    %v616 = vpop.f32.mrf.mxu0
    %617 = vdwg.mxu0
    %v618 = vxor.u32 %v615, 2147483648
    %v619 = vmul.f32 %v618, 1.442695
    %v620 = vpow.pop %v619
    %v621 = vadd.f32 %v620, 1.0
    %v622 = vrcp.pop %v621
    %v623 = vmul.f32 %v621, %v622
    %v624 = vsub.f32 1.0, %v623
    %v625 = vmul.f32 %v622, %v624
    %v626 = vadd.f32 %v622, %v625
    %vm627 = vweird.f32 %v621
    %vm628 = vweird.f32 %v622
    %vm629 = vmor %vm627, %vm628
    %v630 = vsel %vm629, %v622, %v626
    %v631 = vand.u32 2147483647, %v621
    %vm632 = vcmp.eq.f32.partialorder %v631, 8.507059e+37
    %v633 = vand.u32 %v621, 2147483648
    %v634 = vor.u32 1.1754944e-38, %v633
    %v635 = vsel %vm632, %v634, %v630
    %v636 = vmul.f32 1.0, %v635
    %v637 = vmul.f32 %v636, 2.0
    %v638 = vsub.f32 %v637, 1.0
    %v639 = vmul.f32 %v636, %v591
    %641 = vrot.lane.b32.xlu0 %v638, 64
    %v642 = vpop.permute.xlu0 %641
    %v644 = vmul.f32 %v636, %v642
    %646 = vrot.lane.b32.xlu0 %v644, 32
    %v647 = vpop.permute.xlu0 %646
    %v649 = vadd.f32 %v639, %v647
    %v650 = vtanh.pop %v649
    %652 = vrot.lane.b32.xlu0 %v650, 64
    %v653 = vpop.permute.xlu0 %652
    %v655 = vmul.f32 %v636, %v653
    %v656 = vpack.c.bf16 %v307, %v249
    %v657 = vpack.c.bf16 %v423, %v365
    %v658 = vpack.c.bf16 %v539, %v481
    %v659 = vpack.c.bf16 %v655, %v597
    %v660 = vld [vmem:[#allocation7] sm:$0xf]
    %v661 = vld [vmem:[#allocation7 + $0x4] sm:$0xf]
    %v662 = vld [vmem:[#allocation7 + $0x8] sm:$0xf]
    %v663 = vld [vmem:[#allocation7 + $0xc] sm:$0xf]
    %v664 = vld [vmem:[#allocation8] sm:$0xf]
    %v665 = vld [vmem:[#allocation8 + $0x4] sm:$0xf]
    %v666 = vld [vmem:[#allocation8 + $0x8] sm:$0xf]
    %v667 = vld [vmem:[#allocation8 + $0xc] sm:$0xf]
    %v668 = vld [vmem:[%s6] sm:$0x1]
    %v670 = vperm.slane %v668, 0
    %676 = vrot.lane.b32.xlu0 %v656, 32
    %v677 = vpop.permute.xlu0 %676
    %678 = vrot.lane.b32.xlu0 %v657, 32
    %v679 = vpop.permute.xlu0 %678
    %680 = vrot.lane.b32.xlu0 %v658, 32
    %v681 = vpop.permute.xlu0 %680
    %682 = vrot.lane.b32.xlu0 %v659, 32
    %v683 = vpop.permute.xlu0 %682
    %v688 = vunpack.c.l.b16 %v660
    %v689 = vunpack.c.l.b16 %v661
    %v690 = vunpack.c.l.b16 %v662
    %v691 = vunpack.c.l.b16 %v663
    %v692 = vpack.c.b16 %v689, %v688
    %v693 = vpack.c.b16 %v691, %v690
    %v697 = vsel %vm195, %v677, 0
    %v700 = vsel %vm195, %v679, 0
    %v703 = vsel %vm195, %v681, 0
    %v706 = vsel %vm195, %v683, 0
    %708 = vmatpush.bf16.msra.mxu0 0
    %709 = vmatpush.bf16.msra.mxu0 0
    %710 = vmatpush.bf16.msra.mxu0 0
    %711 = vmatpush.bf16.msra.mxu0 0
    %712 = vmatpush.bf16.msra.mxu0 0
    %713 = vmatpush.bf16.msra.mxu0 0
    %714 = vmatpush.bf16.msra.mxu0 %v693
    %715 = vmatpush.bf16.msra.mxu0 %v692
    %716 = vmatmul.bf16.gmra.mxu0 %v697
    %v717 = vpop.f32.mrf.mxu0
    %v718 = vadd.f32 %v670, %v717
    %v719 = vpop.f32.mrf.mxu0
    %v720 = vadd.f32 %v670, %v719
    %721 = vmatmul.bf16.gmra.mxu0 %v700
    %v722 = vpop.f32.mrf.mxu0
    %v723 = vadd.f32 %v670, %v722
    %v724 = vpop.f32.mrf.mxu0
    %v725 = vadd.f32 %v670, %v724
    %726 = vmatmul.bf16.gmra.mxu0 %v703
    %v727 = vpop.f32.mrf.mxu0
    %v728 = vadd.f32 %v670, %v727
    %v729 = vpop.f32.mrf.mxu0
    %v730 = vadd.f32 %v670, %v729
    %731 = vmatmul.bf16.gmra.mxu0 %v706
    %v732 = vpop.f32.mrf.mxu0
    %v733 = vadd.f32 %v670, %v732
    %v734 = vpop.f32.mrf.mxu0
    %v735 = vadd.f32 %v670, %v734
    %736 = vdwg.mxu0
    %v741 = vunpack.c.l.b16 %v664
    %v742 = vunpack.c.l.b16 %v665
    %v743 = vunpack.c.l.b16 %v666
    %v744 = vunpack.c.l.b16 %v667
    %v745 = vpack.c.b16 %v742, %v741
    %v746 = vpack.c.b16 %v744, %v743
    %749 = vmatpush.bf16.msra.mxu0 0
    %750 = vmatpush.bf16.msra.mxu0 0
    %751 = vmatpush.bf16.msra.mxu0 0
    %752 = vmatpush.bf16.msra.mxu0 0
    %753 = vmatpush.bf16.msra.mxu0 0
    %754 = vmatpush.bf16.msra.mxu0 0
    %755 = vmatpush.bf16.msra.mxu0 %v746
    %756 = vmatpush.bf16.msra.mxu0 %v745
    %757 = vmatmul.bf16.gmra.mxu0 %v197
    %v758 = vpop.f32.mrf.mxu0
    %v759 = vadd.f32 %v718, %v758
    %v760 = vpop.f32.mrf.mxu0
    %761 = vdwg.mxu0
    %v762 = vxor.u32 %v759, 2147483648
    %v763 = vmul.f32 %v762, 1.442695
    %v764 = vpow.pop %v763
    %v765 = vadd.f32 %v764, 1.0
    %v766 = vrcp.pop %v765
    %v767 = vmul.f32 %v765, %v766
    %v768 = vsub.f32 1.0, %v767
    %v769 = vmul.f32 %v766, %v768
    %v770 = vadd.f32 %v766, %v769
    %vm771 = vweird.f32 %v765
    %vm772 = vweird.f32 %v766
    %vm773 = vmor %vm771, %vm772
    %v774 = vsel %vm773, %v766, %v770
    %v775 = vand.u32 2147483647, %v765
    %vm776 = vcmp.eq.f32.partialorder %v775, 8.507059e+37
    %v777 = vand.u32 %v765, 2147483648
    %v778 = vor.u32 1.1754944e-38, %v777
    %v779 = vsel %vm776, %v778, %v774
    %v780 = vmul.f32 1.0, %v779
    %v781 = vmul.f32 %v780, 2.0
    %v782 = vsub.f32 %v781, 1.0
    %v783 = vmul.f32 %v780, 0.0
    %785 = vrot.lane.b32.xlu0 %v782, 64
    %v786 = vpop.permute.xlu0 %785
    %v788 = vmul.f32 %v780, %v786
    %790 = vrot.lane.b32.xlu0 %v788, 32
    %v791 = vpop.permute.xlu0 %790
    %v793 = vadd.f32 %v783, %v791
    %v794 = vtanh.pop %v793
    %796 = vrot.lane.b32.xlu0 %v794, 64
    %v797 = vpop.permute.xlu0 %796
    %v799 = vmul.f32 %v780, %v797
    %v800 = vpack.c.bf16 %v799, %v799
    %802 = vrot.lane.b32.xlu0 %v800, 32
    %v803 = vpop.permute.xlu0 %802
    %v805 = vsel %vm195, %v803, 0
    %807 = vmatpush.bf16.msra.mxu0 0
    %808 = vmatpush.bf16.msra.mxu0 0
    %809 = vmatpush.bf16.msra.mxu0 0
    %810 = vmatpush.bf16.msra.mxu0 0
    %811 = vmatpush.bf16.msra.mxu0 0
    %812 = vmatpush.bf16.msra.mxu0 0
    %813 = vmatpush.bf16.msra.mxu0 %v746
    %814 = vmatpush.bf16.msra.mxu0 %v745
    %815 = vmatmul.bf16.gmra.mxu0 %v805
    %v816 = vpop.f32.mrf.mxu0
    %v817 = vadd.f32 %v720, %v816
    %v818 = vpop.f32.mrf.mxu0
    %819 = vdwg.mxu0
    %v820 = vxor.u32 %v817, 2147483648
    %v821 = vmul.f32 %v820, 1.442695
    %v822 = vpow.pop %v821
    %v823 = vadd.f32 %v822, 1.0
    %v824 = vrcp.pop %v823
    %v825 = vmul.f32 %v823, %v824
    %v826 = vsub.f32 1.0, %v825
    %v827 = vmul.f32 %v824, %v826
    %v828 = vadd.f32 %v824, %v827
    %vm829 = vweird.f32 %v823
    %vm830 = vweird.f32 %v824
    %vm831 = vmor %vm829, %vm830
    %v832 = vsel %vm831, %v824, %v828
    %v833 = vand.u32 2147483647, %v823
    %vm834 = vcmp.eq.f32.partialorder %v833, 8.507059e+37
    %v835 = vand.u32 %v823, 2147483648
    %v836 = vor.u32 1.1754944e-38, %v835
    %v837 = vsel %vm834, %v836, %v832
    %v838 = vmul.f32 1.0, %v837
    %v839 = vmul.f32 %v838, 2.0
    %v840 = vsub.f32 %v839, 1.0
    %v841 = vmul.f32 %v838, %v793
    %843 = vrot.lane.b32.xlu0 %v840, 64
    %v844 = vpop.permute.xlu0 %843
    %v846 = vmul.f32 %v838, %v844
    %848 = vrot.lane.b32.xlu0 %v846, 32
    %v849 = vpop.permute.xlu0 %848
    %v851 = vadd.f32 %v841, %v849
    %v852 = vtanh.pop %v851
    %854 = vrot.lane.b32.xlu0 %v852, 64
    %v855 = vpop.permute.xlu0 %854
    %v857 = vmul.f32 %v838, %v855
    %v858 = vpack.c.bf16 %v857, %v857
    %860 = vrot.lane.b32.xlu0 %v858, 32
    %v861 = vpop.permute.xlu0 %860
    %v863 = vsel %vm195, %v861, 0
    %865 = vmatpush.bf16.msra.mxu0 0
    %866 = vmatpush.bf16.msra.mxu0 0
    %867 = vmatpush.bf16.msra.mxu0 0
    %868 = vmatpush.bf16.msra.mxu0 0
    %869 = vmatpush.bf16.msra.mxu0 0
    %870 = vmatpush.bf16.msra.mxu0 0
    %871 = vmatpush.bf16.msra.mxu0 %v746
    %872 = vmatpush.bf16.msra.mxu0 %v745
    %873 = vmatmul.bf16.gmra.mxu0 %v863
    %v874 = vpop.f32.mrf.mxu0
    %v875 = vadd.f32 %v723, %v874
    %v876 = vpop.f32.mrf.mxu0
    %877 = vdwg.mxu0
    %v878 = vxor.u32 %v875, 2147483648
    %v879 = vmul.f32 %v878, 1.442695
    %v880 = vpow.pop %v879
    %v881 = vadd.f32 %v880, 1.0
    %v882 = vrcp.pop %v881
    %v883 = vmul.f32 %v881, %v882
    %v884 = vsub.f32 1.0, %v883
    %v885 = vmul.f32 %v882, %v884
    %v886 = vadd.f32 %v882, %v885
    %vm887 = vweird.f32 %v881
    %vm888 = vweird.f32 %v882
    %vm889 = vmor %vm887, %vm888
    %v890 = vsel %vm889, %v882, %v886
    %v891 = vand.u32 2147483647, %v881
    %vm892 = vcmp.eq.f32.partialorder %v891, 8.507059e+37
    %v893 = vand.u32 %v881, 2147483648
    %v894 = vor.u32 1.1754944e-38, %v893
    %v895 = vsel %vm892, %v894, %v890
    %v896 = vmul.f32 1.0, %v895
    %v897 = vmul.f32 %v896, 2.0
    %v898 = vsub.f32 %v897, 1.0
    %v899 = vmul.f32 %v896, %v851
    %901 = vrot.lane.b32.xlu0 %v898, 64
    %v902 = vpop.permute.xlu0 %901
    %v904 = vmul.f32 %v896, %v902
    %906 = vrot.lane.b32.xlu0 %v904, 32
    %v907 = vpop.permute.xlu0 %906
    %v909 = vadd.f32 %v899, %v907
    %v910 = vtanh.pop %v909
    %912 = vrot.lane.b32.xlu0 %v910, 64
    %v913 = vpop.permute.xlu0 %912
    %v915 = vmul.f32 %v896, %v913
    %v916 = vpack.c.bf16 %v915, %v915
    %918 = vrot.lane.b32.xlu0 %v916, 32
    %v919 = vpop.permute.xlu0 %918
    %v921 = vsel %vm195, %v919, 0
    %923 = vmatpush.bf16.msra.mxu0 0
    %924 = vmatpush.bf16.msra.mxu0 0
    %925 = vmatpush.bf16.msra.mxu0 0
    %926 = vmatpush.bf16.msra.mxu0 0
    %927 = vmatpush.bf16.msra.mxu0 0
    %928 = vmatpush.bf16.msra.mxu0 0
    %929 = vmatpush.bf16.msra.mxu0 %v746
    %930 = vmatpush.bf16.msra.mxu0 %v745
    %931 = vmatmul.bf16.gmra.mxu0 %v921
    %v932 = vpop.f32.mrf.mxu0
    %v933 = vadd.f32 %v725, %v932
    %v934 = vpop.f32.mrf.mxu0
    %935 = vdwg.mxu0
    %v936 = vxor.u32 %v933, 2147483648
    %v937 = vmul.f32 %v936, 1.442695
    %v938 = vpow.pop %v937
    %v939 = vadd.f32 %v938, 1.0
    %v940 = vrcp.pop %v939
    %v941 = vmul.f32 %v939, %v940
    %v942 = vsub.f32 1.0, %v941
    %v943 = vmul.f32 %v940, %v942
    %v944 = vadd.f32 %v940, %v943
    %vm945 = vweird.f32 %v939
    %vm946 = vweird.f32 %v940
    %vm947 = vmor %vm945, %vm946
    %v948 = vsel %vm947, %v940, %v944
    %v949 = vand.u32 2147483647, %v939
    %vm950 = vcmp.eq.f32.partialorder %v949, 8.507059e+37
    %v951 = vand.u32 %v939, 2147483648
    %v952 = vor.u32 1.1754944e-38, %v951
    %v953 = vsel %vm950, %v952, %v948
    %v954 = vmul.f32 1.0, %v953
    %v955 = vmul.f32 %v954, 2.0
    %v956 = vsub.f32 %v955, 1.0
    %v957 = vmul.f32 %v954, %v909
    %959 = vrot.lane.b32.xlu0 %v956, 64
    %v960 = vpop.permute.xlu0 %959
    %v962 = vmul.f32 %v954, %v960
    %964 = vrot.lane.b32.xlu0 %v962, 32
    %v965 = vpop.permute.xlu0 %964
    %v967 = vadd.f32 %v957, %v965
    %v968 = vtanh.pop %v967
    %970 = vrot.lane.b32.xlu0 %v968, 64
    %v971 = vpop.permute.xlu0 %970
    %v973 = vmul.f32 %v954, %v971
    %v974 = vpack.c.bf16 %v973, %v973
    %976 = vrot.lane.b32.xlu0 %v974, 32
    %v977 = vpop.permute.xlu0 %976
    %v979 = vsel %vm195, %v977, 0
    %981 = vmatpush.bf16.msra.mxu0 0
    %982 = vmatpush.bf16.msra.mxu0 0
    %983 = vmatpush.bf16.msra.mxu0 0
    %984 = vmatpush.bf16.msra.mxu0 0
    %985 = vmatpush.bf16.msra.mxu0 0
    %986 = vmatpush.bf16.msra.mxu0 0
    %987 = vmatpush.bf16.msra.mxu0 %v746
    %988 = vmatpush.bf16.msra.mxu0 %v745
    %989 = vmatmul.bf16.gmra.mxu0 %v979
    %v990 = vpop.f32.mrf.mxu0
    %v991 = vadd.f32 %v728, %v990
    %v992 = vpop.f32.mrf.mxu0
    %993 = vdwg.mxu0
    %v994 = vxor.u32 %v991, 2147483648
    %v995 = vmul.f32 %v994, 1.442695
    %v996 = vpow.pop %v995
    %v997 = vadd.f32 %v996, 1.0
    %v998 = vrcp.pop %v997
    %v999 = vmul.f32 %v997, %v998
    %v1000 = vsub.f32 1.0, %v999
    %v1001 = vmul.f32 %v998, %v1000
    %v1002 = vadd.f32 %v998, %v1001
    %vm1003 = vweird.f32 %v997
    %vm1004 = vweird.f32 %v998
    %vm1005 = vmor %vm1003, %vm1004
    %v1006 = vsel %vm1005, %v998, %v1002
    %v1007 = vand.u32 2147483647, %v997
    %vm1008 = vcmp.eq.f32.partialorder %v1007, 8.507059e+37
    %v1009 = vand.u32 %v997, 2147483648
    %v1010 = vor.u32 1.1754944e-38, %v1009
    %v1011 = vsel %vm1008, %v1010, %v1006
    %v1012 = vmul.f32 1.0, %v1011
    %v1013 = vmul.f32 %v1012, 2.0
    %v1014 = vsub.f32 %v1013, 1.0
    %v1015 = vmul.f32 %v1012, %v967
    %1017 = vrot.lane.b32.xlu0 %v1014, 64
    %v1018 = vpop.permute.xlu0 %1017
    %v1020 = vmul.f32 %v1012, %v1018
    %1022 = vrot.lane.b32.xlu0 %v1020, 32
    %v1023 = vpop.permute.xlu0 %1022
    %v1025 = vadd.f32 %v1015, %v1023
    %v1026 = vtanh.pop %v1025
    %1028 = vrot.lane.b32.xlu0 %v1026, 64
    %v1029 = vpop.permute.xlu0 %1028
    %v1031 = vmul.f32 %v1012, %v1029
    %v1032 = vpack.c.bf16 %v1031, %v1031
    %1034 = vrot.lane.b32.xlu0 %v1032, 32
    %v1035 = vpop.permute.xlu0 %1034
    %v1037 = vsel %vm195, %v1035, 0
    %1039 = vmatpush.bf16.msra.mxu0 0
    %1040 = vmatpush.bf16.msra.mxu0 0
    %1041 = vmatpush.bf16.msra.mxu0 0
    %1042 = vmatpush.bf16.msra.mxu0 0
    %1043 = vmatpush.bf16.msra.mxu0 0
    %1044 = vmatpush.bf16.msra.mxu0 0
    %1045 = vmatpush.bf16.msra.mxu0 %v746
    %1046 = vmatpush.bf16.msra.mxu0 %v745
    %1047 = vmatmul.bf16.gmra.mxu0 %v1037
    %v1048 = vpop.f32.mrf.mxu0
    %v1049 = vadd.f32 %v730, %v1048
    %v1050 = vpop.f32.mrf.mxu0
    %1051 = vdwg.mxu0
    %v1052 = vxor.u32 %v1049, 2147483648
    %v1053 = vmul.f32 %v1052, 1.442695
    %v1054 = vpow.pop %v1053
    %v1055 = vadd.f32 %v1054, 1.0
    %v1056 = vrcp.pop %v1055
    %v1057 = vmul.f32 %v1055, %v1056
    %v1058 = vsub.f32 1.0, %v1057
    %v1059 = vmul.f32 %v1056, %v1058
    %v1060 = vadd.f32 %v1056, %v1059
    %vm1061 = vweird.f32 %v1055
    %vm1062 = vweird.f32 %v1056
    %vm1063 = vmor %vm1061, %vm1062
    %v1064 = vsel %vm1063, %v1056, %v1060
    %v1065 = vand.u32 2147483647, %v1055
    %vm1066 = vcmp.eq.f32.partialorder %v1065, 8.507059e+37
    %v1067 = vand.u32 %v1055, 2147483648
    %v1068 = vor.u32 1.1754944e-38, %v1067
    %v1069 = vsel %vm1066, %v1068, %v1064
    %v1070 = vmul.f32 1.0, %v1069
    %v1071 = vmul.f32 %v1070, 2.0
    %v1072 = vsub.f32 %v1071, 1.0
    %v1073 = vmul.f32 %v1070, %v1025
    %1075 = vrot.lane.b32.xlu0 %v1072, 64
    %v1076 = vpop.permute.xlu0 %1075
    %v1078 = vmul.f32 %v1070, %v1076
    %1080 = vrot.lane.b32.xlu0 %v1078, 32
    %v1081 = vpop.permute.xlu0 %1080
    %v1083 = vadd.f32 %v1073, %v1081
    %v1084 = vtanh.pop %v1083
    %1086 = vrot.lane.b32.xlu0 %v1084, 64
    %v1087 = vpop.permute.xlu0 %1086
    %v1089 = vmul.f32 %v1070, %v1087
    %v1090 = vpack.c.bf16 %v1089, %v1089
    %1092 = vrot.lane.b32.xlu0 %v1090, 32
    %v1093 = vpop.permute.xlu0 %1092
    %v1095 = vsel %vm195, %v1093, 0
    %1097 = vmatpush.bf16.msra.mxu0 0
    %1098 = vmatpush.bf16.msra.mxu0 0
    %1099 = vmatpush.bf16.msra.mxu0 0
    %1100 = vmatpush.bf16.msra.mxu0 0
    %1101 = vmatpush.bf16.msra.mxu0 0
    %1102 = vmatpush.bf16.msra.mxu0 0
    %1103 = vmatpush.bf16.msra.mxu0 %v746
    %1104 = vmatpush.bf16.msra.mxu0 %v745
    %1105 = vmatmul.bf16.gmra.mxu0 %v1095
    %v1106 = vpop.f32.mrf.mxu0
    %v1107 = vadd.f32 %v733, %v1106
    %v1108 = vpop.f32.mrf.mxu0
    %1109 = vdwg.mxu0
    %v1110 = vxor.u32 %v1107, 2147483648
    %v1111 = vmul.f32 %v1110, 1.442695
    %v1112 = vpow.pop %v1111
    %v1113 = vadd.f32 %v1112, 1.0
    %v1114 = vrcp.pop %v1113
    %v1115 = vmul.f32 %v1113, %v1114
    %v1116 = vsub.f32 1.0, %v1115
    %v1117 = vmul.f32 %v1114, %v1116
    %v1118 = vadd.f32 %v1114, %v1117
    %vm1119 = vweird.f32 %v1113
    %vm1120 = vweird.f32 %v1114
    %vm1121 = vmor %vm1119, %vm1120
    %v1122 = vsel %vm1121, %v1114, %v1118
    %v1123 = vand.u32 2147483647, %v1113
    %vm1124 = vcmp.eq.f32.partialorder %v1123, 8.507059e+37
    %v1125 = vand.u32 %v1113, 2147483648
    %v1126 = vor.u32 1.1754944e-38, %v1125
    %v1127 = vsel %vm1124, %v1126, %v1122
    %v1128 = vmul.f32 1.0, %v1127
    %v1129 = vmul.f32 %v1128, 2.0
    %v1130 = vsub.f32 %v1129, 1.0
    %v1131 = vmul.f32 %v1128, %v1083
    %1133 = vrot.lane.b32.xlu0 %v1130, 64
    %v1134 = vpop.permute.xlu0 %1133
    %v1136 = vmul.f32 %v1128, %v1134
    %1138 = vrot.lane.b32.xlu0 %v1136, 32
    %v1139 = vpop.permute.xlu0 %1138
    %v1141 = vadd.f32 %v1131, %v1139
    %v1142 = vtanh.pop %v1141
    %1144 = vrot.lane.b32.xlu0 %v1142, 64
    %v1145 = vpop.permute.xlu0 %1144
    %v1147 = vmul.f32 %v1128, %v1145
    %v1148 = vpack.c.bf16 %v1147, %v1147
    %1150 = vrot.lane.b32.xlu0 %v1148, 32
    %v1151 = vpop.permute.xlu0 %1150
    %v1153 = vsel %vm195, %v1151, 0
    %1155 = vmatpush.bf16.msra.mxu0 0
    %1156 = vmatpush.bf16.msra.mxu0 0
    %1157 = vmatpush.bf16.msra.mxu0 0
    %1158 = vmatpush.bf16.msra.mxu0 0
    %1159 = vmatpush.bf16.msra.mxu0 0
    %1160 = vmatpush.bf16.msra.mxu0 0
    %1161 = vmatpush.bf16.msra.mxu0 %v746
    %1162 = vmatpush.bf16.msra.mxu0 %v745
    %1163 = vmatmul.bf16.gmra.mxu0 %v1153
    %v1164 = vpop.f32.mrf.mxu0
    %v1165 = vadd.f32 %v735, %v1164
    %v1166 = vpop.f32.mrf.mxu0
    %1167 = vdwg.mxu0
    %v1168 = vxor.u32 %v1165, 2147483648
    %v1169 = vmul.f32 %v1168, 1.442695
    %v1170 = vpow.pop %v1169
    %v1171 = vadd.f32 %v1170, 1.0
    %v1172 = vrcp.pop %v1171
    %v1173 = vmul.f32 %v1171, %v1172
    %v1174 = vsub.f32 1.0, %v1173
    %v1175 = vmul.f32 %v1172, %v1174
    %v1176 = vadd.f32 %v1172, %v1175
    %vm1177 = vweird.f32 %v1171
    %vm1178 = vweird.f32 %v1172
    %vm1179 = vmor %vm1177, %vm1178
    %v1180 = vsel %vm1179, %v1172, %v1176
    %v1181 = vand.u32 2147483647, %v1171
    %vm1182 = vcmp.eq.f32.partialorder %v1181, 8.507059e+37
    %v1183 = vand.u32 %v1171, 2147483648
    %v1184 = vor.u32 1.1754944e-38, %v1183
    %v1185 = vsel %vm1182, %v1184, %v1180
    %v1186 = vmul.f32 1.0, %v1185
    %v1187 = vmul.f32 %v1186, 2.0
    %v1188 = vsub.f32 %v1187, 1.0
    %v1189 = vmul.f32 %v1186, %v1141
    %1191 = vrot.lane.b32.xlu0 %v1188, 64
    %v1192 = vpop.permute.xlu0 %1191
    %v1194 = vmul.f32 %v1186, %v1192
    %1196 = vrot.lane.b32.xlu0 %v1194, 32
    %v1197 = vpop.permute.xlu0 %1196
    %v1199 = vadd.f32 %v1189, %v1197
    %v1200 = vtanh.pop %v1199
    %1202 = vrot.lane.b32.xlu0 %v1200, 64
    %v1203 = vpop.permute.xlu0 %1202
    %v1205 = vmul.f32 %v1186, %v1203
    %v1206 = vpack.c.bf16 %v1205, %v1205
    %v1207 = vld [vmem:[%s7] sm:$0xf]
    %v1208 = vld [vmem:[%s7 + $0x4] sm:$0xf]
    %v1209 = vld [vmem:[%s7 + $0x8] sm:$0xf]
    %v1210 = vld [vmem:[%s7 + $0xc] sm:$0xf]
    %v1211 = vld [vmem:[%s8] sm:$0x1]
    %v1213 = vperm.slane %v1211, 0
    %1216 = vrot.lane.b32.xlu0 %v1206, 32
    %v1217 = vpop.permute.xlu0 %1216
    %v1222 = vunpack.c.l.b16 %v1207
    %v1223 = vunpack.c.l.b16 %v1208
    %v1224 = vunpack.c.l.b16 %v1209
    %v1225 = vunpack.c.l.b16 %v1210
    %v1226 = vpack.c.b16 %v1223, %v1222
    %v1227 = vpack.c.b16 %v1225, %v1224
    %v1231 = vsel %vm195, %v1217, 0
    %1233 = vmatpush.bf16.msra.mxu0 0
    %1234 = vmatpush.bf16.msra.mxu0 0
    %1235 = vmatpush.bf16.msra.mxu0 0
    %1236 = vmatpush.bf16.msra.mxu0 0
    %1237 = vmatpush.bf16.msra.mxu0 0
    %1238 = vmatpush.bf16.msra.mxu0 0
    %1239 = vmatpush.bf16.msra.mxu0 %v1227
    %1240 = vmatpush.bf16.msra.mxu0 %v1226
    %1241 = vmatmul.bf16.gmra.mxu0 %v1231
    %v1242 = vpop.f32.mrf.mxu0
    %v1243 = vadd.f32 %v1213, %v1242
    %v1244 = vpop.f32.mrf.mxu0
    %1245 = vdwg.mxu0
    %vm1246 = vcmask 64512
    %1247 = vst.msk [vmem:[#allocation10] sm:$0xff] %vm1246, %v1243
    // Predicated region
    $region54: #{tpu_custom_call.1} parent=1 // pred_check
      _
    $region55: #{tpu_custom_call.1} parent=1 // pred_check_branch
      %1249 = sbr.rel (0) target = $region57
    $region56: #{tpu_custom_call.1} parent=1 // pred_region
      %1251 = vsyncadd [#allocation4], 0
      %s1253 = sshll.u32 [#allocation10], 4
      %s1254 = int_to_ptr.vmem [resolvable:$true] %s1253
      %s1255 = sshll.u32 %s9, 4
      %s1256 = int_to_ptr.hbm [resolvable:$true] %s1255
      %1258 = dma.vmem_to_hbm [thread:$0]  %s1254, 128, %s1256, [#allocation4]
    $region57: #{tpu_custom_call.1} parent=1 // pred_fallthru
      _
    // Predicated region
    $region58: #{tpu_custom_call.1} parent=1 // pred_check
      _
    $region59: #{tpu_custom_call.1} parent=1 // pred_check_branch
      %1260 = sbr.rel (0) target = $region61
    $region60: #{tpu_custom_call.1} parent=1 // pred_region
      %1262 = dma.done [#allocation4], 128
    $region61: #{tpu_custom_call.1} parent=1 // pred_fallthru
      _
    %1263 = vsyncpa [#allocation3], 1
    %1264 = vsyncpa [#allocation6], 1
    %1265 = vsyncpa [#allocation9], 1
    %1266 = vsyncpa [#allocation4], 1

</llo_original>
